<compile_context>
chip_gen: v6e
topology: v6e:2x2x1
jax: 0.10.0
libtpu: 0.0.40
codegen_flags: <defaults>
</compile_context>

<pallas_src>
import functools

import jax
import jax.numpy as jnp
from jax.experimental import pallas as pl
from jax.experimental.pallas import tpu as pltpu

G_HIDDEN = 256
D_HIDDEN = 256
LANE = 128
ROW_ALIGN = 16  # bf16 packs 16 sublanes/vreg -> 16-row pieces keep concat tile-aligned


def _round_up(n, m):
    return ((n + m - 1) // m) * m


# ----------------------------------------------------------------------------
# Single fused kernel: Generator + Discriminator, everything VMEM-resident.
# ----------------------------------------------------------------------------
def _gan_fused_kernel(*refs, mode):
    if mode == "D":
        (x_ref, z_ref, gw1_ref, gb1_ref, gw2_ref, gb2_ref,
         dw1_hbm, db1_ref, dw2_ref, db2_ref,
         score_ref, dw1_vmem, dw1_sem) = refs
    else:
        (z_ref, gw1_ref, gb1_ref, gw2_ref, gb2_ref,
         dw1_hbm, db1_ref, dw2_ref, db2_ref,
         fake_ref, score_ref, dw1_vmem, dw1_sem) = refs

    # Prefetch the largest weight (d_w1: hw x 256 bf16) behind generator compute.
    dw1_cp = pltpu.make_async_copy(dw1_hbm, dw1_vmem, dw1_sem)
    dw1_cp.start()

    # ---- Generator: fc1 -> LeakyReLU(0.2) -> fc2 -> Tanh (f32 activations) ----
    h_g = jnp.dot(z_ref[...].astype(jnp.bfloat16), gw1_ref[...],
                  preferred_element_type=jnp.float32) + gb1_ref[...]
    h_g = jnp.where(h_g > 0, h_g, 0.2 * h_g)
    fake = jnp.dot(h_g.astype(jnp.bfloat16), gw2_ref[...],
                   preferred_element_type=jnp.float32) + gb2_ref[...]
    fake = jnp.tanh(fake)                              # (fakes_pad, H*W) f32
    fake_bf16 = fake.astype(jnp.bfloat16)

    # ---- Discriminator input: [real ; fake], assembled in registers ----
    if mode == "D":
        imgs = jnp.concatenate([x_ref[...], fake_bf16], axis=0)  # (rows_pad, hw) bf16
    else:
        fake_ref[...] = fake                           # export fake images
        imgs = fake_bf16

    # ---- Discriminator: fc1 -> LeakyReLU(0.2) -> fc2 (lane-padded) -> Sigmoid ----
    dw1_cp.wait()                                      # d_w1 now resident in VMEM
    h_d = jnp.dot(imgs, dw1_vmem[...],
                  preferred_element_type=jnp.float32) + db1_ref[...]
    h_d = jnp.where(h_d > 0, h_d, 0.2 * h_d)
    logits = jnp.dot(h_d.astype(jnp.bfloat16), dw2_ref[...],
                     preferred_element_type=jnp.float32) + db2_ref[...]
    # Exact sigmoid (exp on EUP + divide); approx reciprocal unnecessary here.
    score_ref[...] = 1.0 / (1.0 + jnp.exp(-logits))


# ----------------------------------------------------------------------------
# Parameter construction (deterministic, in-script; kernel-ready layouts)
# ----------------------------------------------------------------------------
def init_gan_params(key, num_fakes=16, rand_dim=128, size=(32, 32)):
    H, W = size
    hw = H * W
    ks = jax.random.split(key, 5)
    scale = 0.02
    fakes_pad = _round_up(num_fakes, ROW_ALIGN)

    # Fixed latent, zero-padded to a 16-aligned row count (padded rows produce
    # harmless garbage rows that are sliced off in the wrapper).
    z = jax.random.normal(ks[0], (num_fakes, rand_dim), jnp.float32)
    z_pad = jnp.zeros((fakes_pad, rand_dim), jnp.float32).at[:num_fakes].set(z)

    # Final D layer padded to a lane-dense (256, 128) / (1, 128); col 0 is real.
    d_w2 = scale * jax.random.normal(ks[4], (D_HIDDEN, 1), jnp.float32)
    d_w2_pad = jnp.zeros((D_HIDDEN, LANE), jnp.float32).at[:, 0:1].set(d_w2)
    d_b2_pad = jnp.zeros((1, LANE), jnp.float32)

    return {
        "num_fakes": num_fakes, "fakes_pad": fakes_pad, "size": size, "hw": hw,
        "rand_dim": rand_dim,
        "z": z_pad,
        # MXU operands stored as bf16 (f32 accumulation in-kernel); biases f32.
        "g_w1": (scale * jax.random.normal(ks[1], (rand_dim, G_HIDDEN),
                                           jnp.float32)).astype(jnp.bfloat16),
        "g_b1": jnp.zeros((1, G_HIDDEN), jnp.float32),
        "g_w2": (scale * jax.random.normal(ks[2], (G_HIDDEN, hw),
                                           jnp.float32)).astype(jnp.bfloat16),
        "g_b2": jnp.zeros((1, hw), jnp.float32),
        "d_w1": (scale * jax.random.normal(ks[3], (hw, D_HIDDEN),
                                           jnp.float32)).astype(jnp.bfloat16),
        "d_b1": jnp.zeros((1, D_HIDDEN), jnp.float32),
        "d_w2": d_w2_pad.astype(jnp.bfloat16),
        "d_b2": d_b2_pad,
    }


def _nbytes(*arrs):
    return int(sum(int(a.size) * a.dtype.itemsize for a in arrs))


# ----------------------------------------------------------------------------
# GAN forward (mirrors the PyTorch GAN.forward branching on `mode`)
# ----------------------------------------------------------------------------
def gan_forward(params, x=None, mode="D"):
    H, W = params["size"]
    hw = params["hw"]
    num_fakes = params["num_fakes"]
    fakes_pad = params["fakes_pad"]
    rand_dim = params["rand_dim"]

    weight_args = (params["z"], params["g_w1"], params["g_b1"],
                   params["g_w2"], params["g_b2"],
                   params["d_w1"], params["d_b1"],
                   params["d_w2"], params["d_b2"])
    weight_specs = [
        pl.BlockSpec((fakes_pad, rand_dim), lambda: (0, 0)),
        pl.BlockSpec((rand_dim, G_HIDDEN), lambda: (0, 0)),
        pl.BlockSpec((1, G_HIDDEN), lambda: (0, 0)),
        pl.BlockSpec((G_HIDDEN, hw), lambda: (0, 0)),
        pl.BlockSpec((1, hw), lambda: (0, 0)),
        pl.BlockSpec(memory_space=pl.ANY),            # d_w1: manual prefetch DMA
        pl.BlockSpec((1, D_HIDDEN), lambda: (0, 0)),
        pl.BlockSpec((D_HIDDEN, LANE), lambda: (0, 0)),
        pl.BlockSpec((1, LANE), lambda: (0, 0)),
    ]
    # d_w1 VMEM landing buffer + its DMA completion semaphore.
    dw1_scratch = [pltpu.VMEM((hw, D_HIDDEN), jnp.bfloat16),
                   pltpu.SemaphoreType.DMA(())]

    g_flops = 2 * fakes_pad * (rand_dim * G_HIDDEN + G_HIDDEN * hw)

    if mode == "D":
        batch = x.shape[0]
        batch_pad = _round_up(batch, ROW_ALIGN)
        rows_pad = batch_pad + fakes_pad

        # Cast + flatten + pad in one shot (bf16 halves the x DMA).
        x_bf16 = x.reshape(batch, hw).astype(jnp.bfloat16)
        x_pad = jnp.pad(x_bf16, ((0, batch_pad - batch), (0, 0)))

        cost = pl.CostEstimate(
            flops=g_flops + 2 * rows_pad * (hw * D_HIDDEN + D_HIDDEN * LANE),
            transcendentals=fakes_pad * hw + rows_pad * LANE,
            bytes_accessed=_nbytes(x_pad, *weight_args) + rows_pad * LANE * 4,
        )

        kernel = functools.partial(_gan_fused_kernel, mode="D")
        scores = pl.pallas_call(
            kernel,
            out_shape=jax.ShapeDtypeStruct((rows_pad, LANE), jnp.float32),
            in_specs=[pl.BlockSpec((batch_pad, hw), lambda: (0, 0))] + weight_specs,
            out_specs=pl.BlockSpec((rows_pad, LANE), lambda: (0, 0)),
            scratch_shapes=dw1_scratch,
            cost_estimate=cost,
        )(x_pad, *weight_args)

        real_scores = scores[:batch, 0:1]
        fake_scores = scores[batch_pad:batch_pad + num_fakes, 0:1]
        return jnp.concatenate([real_scores, fake_scores], axis=0)  # (batch+num_fakes, 1)

    else:
        cost = pl.CostEstimate(
            flops=g_flops + 2 * fakes_pad * (hw * D_HIDDEN + D_HIDDEN * LANE),
            transcendentals=fakes_pad * hw + fakes_pad * LANE,
            bytes_accessed=_nbytes(*weight_args)
            + fakes_pad * hw * 4 + fakes_pad * LANE * 4,
        )

        kernel = functools.partial(_gan_fused_kernel, mode="G")
        fake_flat, scores = pl.pallas_call(
            kernel,
            out_shape=(jax.ShapeDtypeStruct((fakes_pad, hw), jnp.float32),
                       jax.ShapeDtypeStruct((fakes_pad, LANE), jnp.float32)),
            in_specs=weight_specs,
            out_specs=(pl.BlockSpec((fakes_pad, hw), lambda: (0, 0)),
                       pl.BlockSpec((fakes_pad, LANE), lambda: (0, 0))),
            scratch_shapes=dw1_scratch,
            cost_estimate=cost,
        )(*weight_args)

        fake_imgs = fake_flat[:num_fakes].reshape(num_fakes, 1, H, W)  # NCHW
        return fake_imgs, scores[:num_fakes, 0:1]


# ----------------------------------------------------------------------------
if __name__ == "__main__":
    num_fakes, rand_dim, size = 8, 128, (32, 32)
    batch = 2

    key = jax.random.PRNGKey(0)
    pkey, xkey = jax.random.split(key)
    params = init_gan_params(pkey, num_fakes=num_fakes, rand_dim=rand_dim, size=size)

    # Real images, NCHW like the PyTorch module: (batch, 1, H, W)
    x = jax.random.normal(xkey, (batch, 1) + size, jnp.float32)

    # mode='D': discriminator scores for [real ; fake]  -> (batch+num_fakes, 1)
    d_out = gan_forward(params, x, mode="D")
    d_out = jax.block_until_ready(d_out)
    assert d_out.shape == (batch + num_fakes, 1)
    assert bool(jnp.all(jnp.isfinite(d_out)))
    assert bool(jnp.all((d_out >= 0.0) & (d_out <= 1.0)))

    # mode='G': (fake_imgs, scores)
    fake_imgs, g_out = gan_forward(params, mode="G")
    jax.block_until_ready(fake_imgs)
    jax.block_until_ready(g_out)
    assert fake_imgs.shape == (num_fakes, 1) + size
    assert g_out.shape == (num_fakes, 1)
    assert bool(jnp.all(jnp.isfinite(g_out)))
    assert bool(jnp.all(jnp.abs(fake_imgs) <= 1.0))  # tanh range

    print("KERNEL_OK")
</pallas_src>

<mosaic_0001>
module attributes {stable_mosaic.version = 11 : i64} {
  func.func @_gan_fused_kernel(%arg0: memref<16x1024xbf16, #tpu.memory_space<vmem>>, %arg1: memref<16x128xf32, #tpu.memory_space<vmem>>, %arg2: memref<128x256xbf16, #tpu.memory_space<vmem>>, %arg3: memref<1x256xf32, #tpu.memory_space<vmem>>, %arg4: memref<256x1024xbf16, #tpu.memory_space<vmem>>, %arg5: memref<1x1024xf32, #tpu.memory_space<vmem>>, %arg6: memref<1024x256xbf16, #tpu.memory_space<any>>, %arg7: memref<1x256xf32, #tpu.memory_space<vmem>>, %arg8: memref<256x128xbf16, #tpu.memory_space<vmem>>, %arg9: memref<1x128xf32, #tpu.memory_space<vmem>>, %arg10: memref<32x128xf32, #tpu.memory_space<vmem>>, %arg11: memref<1024x256xbf16, #tpu.memory_space<vmem>>, %arg12: memref<!tpu.dma_semaphore, #tpu.memory_space<semaphore_mem>>) attributes {dimension_semantics = [], scalar_prefetch = 0 : i64, scratch_operands = 2 : i64, tpu.core_type = #tpu.core_type<tc>} {
    tpu.enqueue_dma source(%arg6 : memref<1024x256xbf16, #tpu.memory_space<any>>) target(%arg11 : memref<1024x256xbf16, #tpu.memory_space<vmem>>) target_semaphore(%arg12 : memref<!tpu.dma_semaphore, #tpu.memory_space<semaphore_mem>>)
    %c0 = arith.constant 0 : index
    %c0_0 = arith.constant 0 : index
    %0 = vector.load %arg1[%c0, %c0_0] : memref<16x128xf32, #tpu.memory_space<vmem>>, vector<16x128xf32>
    %1 = arith.truncf %0 : vector<16x128xf32> to vector<16x128xbf16>
    %c0_1 = arith.constant 0 : index
    %c0_2 = arith.constant 0 : index
    %2 = vector.load %arg2[%c0_1, %c0_2] : memref<128x256xbf16, #tpu.memory_space<vmem>>, vector<128x256xbf16>
    %cst = arith.constant dense<0.000000e+00> : vector<16x256xf32>
    %3 = tpu.matmul %1, %2, %cst {dimension_numbers = #tpu.dot_dimension_numbers<[1], [0], [0], [1], [0, 0, 1, 1], [], []>} : vector<16x128xbf16>, vector<128x256xbf16>, vector<16x256xf32> -> vector<16x256xf32>
    %c0_3 = arith.constant 0 : index
    %c0_4 = arith.constant 0 : index
    %4 = vector.load %arg3[%c0_3, %c0_4] : memref<1x256xf32, #tpu.memory_space<vmem>>, vector<1x256xf32>
    %5 = vector.broadcast %4 : vector<1x256xf32> to vector<16x256xf32>
    %6 = arith.addf %3, %5 : vector<16x256xf32>
    %cst_5 = arith.constant 0.000000e+00 : f32
    %7 = vector.broadcast %cst_5 : f32 to vector<16x256xf32>
    %8 = arith.cmpf ogt, %6, %7 : vector<16x256xf32>
    %cst_6 = arith.constant 2.000000e-01 : f32
    %9 = vector.broadcast %cst_6 : f32 to vector<16x256xf32>
    %10 = arith.mulf %9, %6 : vector<16x256xf32>
    %11 = arith.select %8, %6, %10 : vector<16x256xi1>, vector<16x256xf32>
    %12 = arith.truncf %11 : vector<16x256xf32> to vector<16x256xbf16>
    %c0_7 = arith.constant 0 : index
    %c0_8 = arith.constant 0 : index
    %13 = vector.load %arg4[%c0_7, %c0_8] : memref<256x1024xbf16, #tpu.memory_space<vmem>>, vector<256x1024xbf16>
    %cst_9 = arith.constant dense<0.000000e+00> : vector<16x1024xf32>
    %14 = tpu.matmul %12, %13, %cst_9 {dimension_numbers = #tpu.dot_dimension_numbers<[1], [0], [0], [1], [0, 0, 1, 1], [], []>} : vector<16x256xbf16>, vector<256x1024xbf16>, vector<16x1024xf32> -> vector<16x1024xf32>
    %c0_10 = arith.constant 0 : index
    %c0_11 = arith.constant 0 : index
    %15 = vector.load %arg5[%c0_10, %c0_11] : memref<1x1024xf32, #tpu.memory_space<vmem>>, vector<1x1024xf32>
    %16 = vector.broadcast %15 : vector<1x1024xf32> to vector<16x1024xf32>
    %17 = arith.addf %14, %16 : vector<16x1024xf32>
    %18 = math.tanh %17 : vector<16x1024xf32>
    %19 = arith.truncf %18 : vector<16x1024xf32> to vector<16x1024xbf16>
    %c0_12 = arith.constant 0 : index
    %c0_13 = arith.constant 0 : index
    %20 = vector.load %arg0[%c0_12, %c0_13] : memref<16x1024xbf16, #tpu.memory_space<vmem>>, vector<16x1024xbf16>
    %21 = tpu.concatenate %20, %19 in 0 : vector<16x1024xbf16>, vector<16x1024xbf16> -> vector<32x1024xbf16>
    tpu.wait_dma2 semaphore(%arg12 : memref<!tpu.dma_semaphore, #tpu.memory_space<semaphore_mem>>) src(%arg6 : memref<1024x256xbf16, #tpu.memory_space<any>>) dst(%arg11 : memref<1024x256xbf16, #tpu.memory_space<vmem>>)
    %c0_14 = arith.constant 0 : index
    %c0_15 = arith.constant 0 : index
    %22 = vector.load %arg11[%c0_14, %c0_15] : memref<1024x256xbf16, #tpu.memory_space<vmem>>, vector<1024x256xbf16>
    %cst_16 = arith.constant dense<0.000000e+00> : vector<32x256xf32>
    %23 = tpu.matmul %21, %22, %cst_16 {dimension_numbers = #tpu.dot_dimension_numbers<[1], [0], [0], [1], [0, 0, 1, 1], [], []>} : vector<32x1024xbf16>, vector<1024x256xbf16>, vector<32x256xf32> -> vector<32x256xf32>
    %c0_17 = arith.constant 0 : index
    %c0_18 = arith.constant 0 : index
    %24 = vector.load %arg7[%c0_17, %c0_18] : memref<1x256xf32, #tpu.memory_space<vmem>>, vector<1x256xf32>
    %25 = vector.broadcast %24 : vector<1x256xf32> to vector<32x256xf32>
    %26 = arith.addf %23, %25 : vector<32x256xf32>
    %cst_19 = arith.constant 0.000000e+00 : f32
    %27 = vector.broadcast %cst_19 : f32 to vector<32x256xf32>
    %28 = arith.cmpf ogt, %26, %27 : vector<32x256xf32>
    %cst_20 = arith.constant 2.000000e-01 : f32
    %29 = vector.broadcast %cst_20 : f32 to vector<32x256xf32>
    %30 = arith.mulf %29, %26 : vector<32x256xf32>
    %31 = arith.select %28, %26, %30 : vector<32x256xi1>, vector<32x256xf32>
    %32 = arith.truncf %31 : vector<32x256xf32> to vector<32x256xbf16>
    %c0_21 = arith.constant 0 : index
    %c0_22 = arith.constant 0 : index
    %33 = vector.load %arg8[%c0_21, %c0_22] : memref<256x128xbf16, #tpu.memory_space<vmem>>, vector<256x128xbf16>
    %cst_23 = arith.constant dense<0.000000e+00> : vector<32x128xf32>
    %34 = tpu.matmul %32, %33, %cst_23 {dimension_numbers = #tpu.dot_dimension_numbers<[1], [0], [0], [1], [0, 0, 1, 1], [], []>} : vector<32x256xbf16>, vector<256x128xbf16>, vector<32x128xf32> -> vector<32x128xf32>
    %c0_24 = arith.constant 0 : index
    %c0_25 = arith.constant 0 : index
    %35 = vector.load %arg9[%c0_24, %c0_25] : memref<1x128xf32, #tpu.memory_space<vmem>>, vector<1x128xf32>
    %36 = vector.broadcast %35 : vector<1x128xf32> to vector<32x128xf32>
    %37 = arith.addf %34, %36 : vector<32x128xf32>
    %cst_26 = arith.constant 0.000000e+00 : f32
    %38 = vector.broadcast %cst_26 : f32 to vector<32x128xf32>
    %39 = arith.subf %38, %37 : vector<32x128xf32>
    %40 = math.exp %39 : vector<32x128xf32>
    %cst_27 = arith.constant 1.000000e+00 : f32
    %41 = vector.broadcast %cst_27 : f32 to vector<32x128xf32>
    %42 = arith.addf %41, %40 : vector<32x128xf32>
    %cst_28 = arith.constant 1.000000e+00 : f32
    %43 = vector.broadcast %cst_28 : f32 to vector<32x128xf32>
    %44 = arith.divf %43, %42 : vector<32x128xf32>
    %c0_29 = arith.constant 0 : index
    %c0_30 = arith.constant 0 : index
    %45 = vector.load %arg10[%c0_29, %c0_30] : memref<32x128xf32, #tpu.memory_space<vmem>>, vector<32x128xf32>
    tpu.vector_store %arg10[%c0_29, %c0_30], %44 {strides = array<i32>} : memref<32x128xf32, #tpu.memory_space<vmem>>, vector<32x128xf32>,
    return
  }
}

</mosaic_0001>

<llo_original>
// kernel: tpu_custom_call.1
$region0: #{tpu_custom_call.1}
  #allocation0 [shape = 'u32[]', space=smem, size = 0x4, offset = 0x4, fixed_abs, tag = 'smem constant byte address 0x4 - core index']
  #allocation1 [shape = 'u32[144,128]{1,0:T(1,128)}', space=vmem, size = 0x12000, scoped, tag = 'internal scratch']
  #allocation2 [shape = 'bf16[1024,256]{1,0:T(8,128)(2,1)}', space=vmem, size = 0x80000, scoped, tag = 'scratch operand']
  #allocation3 [shape = 's32[1]{0}', space=sflag, size = 0x4, scoped, tag = 'scratch operand']
  #allocation16 [shape = 's32[]', space=sflag, size = 0x4, offset = 0, fixed_abs, tag = 'sflag constant byte address 0x0 - dummy sync flag']
  #allocation17 [shape = 's32[]', space=sflag, size = 0x4, offset = 0, fixed_abs, tag = 'sflag constant byte address 0x0 - dummy sync flag']
  #allocation18 [shape = 'u32[]', space=smem, size = 0x4, offset = 0x44, fixed_abs, tag = 'smem constant byte address 0x44 - assertion arg 0']
  #allocation19 [shape = 'u32[]', space=smem, size = 0x4, offset = 0x48, fixed_abs, tag = 'smem constant byte address 0x48 - assertion arg 1']
  %s0 = inlined_call_operand.hbm [shape: bf16[16,1024], index: 0, kind: input, shape index: {}]
  %s1 = inlined_call_operand.hbm [shape: f32[16,128], index: 1, kind: input, shape index: {}]
  %s2 = inlined_call_operand.hbm [shape: bf16[128,256], index: 2, kind: input, shape index: {}]
  %s3 = inlined_call_operand.hbm [shape: f32[1,256], index: 3, kind: input, shape index: {}]
  %s4 = inlined_call_operand.hbm [shape: bf16[256,1024], index: 4, kind: input, shape index: {}]
  %s5 = inlined_call_operand.vmem [shape: f32[1,1024], index: 5, kind: input, shape index: {}]
  %s6 = inlined_call_operand.hbm [shape: bf16[1024,256], index: 6, kind: input, shape index: {}]
  %s7 = inlined_call_operand.vmem [shape: f32[1,256], index: 7, kind: input, shape index: {}]
  %s8 = inlined_call_operand.hbm [shape: bf16[256,128], index: 8, kind: input, shape index: {}]
  %s9 = inlined_call_operand.vmem [shape: f32[1,128], index: 9, kind: input, shape index: {}]
  %s10 = inlined_call_operand.hbm [shape: f32[32,128], index: 10, kind: output, shape index: {}]
  %s11 = sld [smem:[#allocation0]]
  $region74: #{tpu_custom_call.1} parent=0
    _
  %s13 = ssub.s32 1, %s11
  %s14 = scalar_select 0, %s13, %s11
  $region1: #{tpu_custom_call.1} parent=0
    #allocation4 [shape = 'u8[32768]{0}', space=vmem, size = 0x8000, scoped, tag = 'input window, operand 0, single buffered']
    #allocation5 [shape = 's32[1]{0}', space=sflag, size = 0x4, scoped, tag = 'scoped memory for tpu_custom_call.1']
    #allocation6 [shape = 's32[1]{0}', space=sflag, size = 0x4, scoped, tag = 'scoped memory for tpu_custom_call.1']
    #allocation7 [shape = 'u8[8192]{0}', space=vmem, size = 0x2000, scoped, tag = 'input window, operand 1, single buffered']
    #allocation8 [shape = 's32[1]{0}', space=sflag, size = 0x4, scoped, tag = 'scoped memory for tpu_custom_call.1']
    #allocation9 [shape = 'u8[65536]{0}', space=vmem, size = 0x10000, scoped, tag = 'input window, operand 2, single buffered']
    #allocation10 [shape = 'u8[1024]{0}', space=vmem, size = 0x400, scoped, tag = 'input window, operand 3, single buffered']
    #allocation11 [shape = 's32[1]{0}', space=sflag, size = 0x4, scoped, tag = 'scoped memory for tpu_custom_call.1']
    #allocation12 [shape = 'u8[524288]{0}', space=vmem, size = 0x80000, scoped, tag = 'input window, operand 4, single buffered']
    #allocation13 [shape = 'u8[65536]{0}', space=vmem, size = 0x10000, scoped, tag = 'input window, operand 8, single buffered']
    #allocation14 [shape = 's32[1]{0}', space=sflag, size = 0x4, scoped, tag = 'scoped memory for tpu_custom_call.1']
    #allocation15 [shape = 'u8[16384]{0}', space=vmem, size = 0x4000, scoped, tag = 'output window, operand 0, single buffered']
    %15 = vsyncpa [#allocation5], 0
    %16 = vsyncpa [#allocation8], 0
    %17 = vsyncpa [#allocation11], 0
    %18 = vsyncpa [#allocation14], 0
    %19 = vsyncpa [#allocation6], 0
    // Predicated region
    $region2: #{tpu_custom_call.1} parent=1 // pred_check
      _
    $region3: #{tpu_custom_call.1} parent=1 // pred_check_branch
      %21 = sbr.rel (0) target = $region5
    $region4: #{tpu_custom_call.1} parent=1 // pred_region
      %s23 = ssub.s32 1024, 1024
      %24 = vsyncadd [#allocation5], %s23
      %s25 = sshll.u32 [#allocation4], 4
      %s26 = int_to_ptr.vmem [resolvable:$true] %s25
      %31 = dma.hbm_to_vmem [thread:$0]  %s0, 1024, %s26, [#allocation5], 512, 512, 32
    $region5: #{tpu_custom_call.1} parent=1 // pred_fallthru
      _
    // Predicated region
    $region6: #{tpu_custom_call.1} parent=1 // pred_check
      _
    $region7: #{tpu_custom_call.1} parent=1 // pred_check_branch
      %33 = sbr.rel (0) target = $region9
    $region8: #{tpu_custom_call.1} parent=1 // pred_region
      %s35 = ssub.s32 256, 256
      %36 = vsyncadd [#allocation8], %s35
      %s37 = sshll.u32 [#allocation7], 4
      %s38 = int_to_ptr.vmem [resolvable:$true] %s37
      %43 = dma.hbm_to_vmem [thread:$0]  %s1, 256, %s38, [#allocation8], 128, 128, 8
    $region9: #{tpu_custom_call.1} parent=1 // pred_fallthru
      _
    // Predicated region
    $region10: #{tpu_custom_call.1} parent=1 // pred_check
      _
    $region11: #{tpu_custom_call.1} parent=1 // pred_check_branch
      %45 = sbr.rel (0) target = $region13
    $region12: #{tpu_custom_call.1} parent=1 // pred_region
      %s47 = ssub.s32 2048, 2048
      %48 = vsyncadd [#allocation8], %s47
      %s49 = sshll.u32 [#allocation9], 4
      %s50 = int_to_ptr.vmem [resolvable:$true] %s49
      %55 = dma.hbm_to_vmem [thread:$0]  %s2, 2048, %s50, [#allocation8], 128, 128, 8
    $region13: #{tpu_custom_call.1} parent=1 // pred_fallthru
      _
    // Predicated region
    $region14: #{tpu_custom_call.1} parent=1 // pred_check
      _
    $region15: #{tpu_custom_call.1} parent=1 // pred_check_branch
      %57 = sbr.rel (0) target = $region17
    $region16: #{tpu_custom_call.1} parent=1 // pred_region
      %s59 = ssub.s32 32, 32
      %60 = vsyncadd [#allocation11], %s59
      %s62 = sshll.u32 [#allocation10], 4
      %s63 = int_to_ptr.vmem [resolvable:$true] %s62
      %65 = dma.hbm_to_vmem [thread:$0]  %s3, 32, %s63, [#allocation11]
    $region17: #{tpu_custom_call.1} parent=1 // pred_fallthru
      _
    // Predicated region
    $region18: #{tpu_custom_call.1} parent=1 // pred_check
      _
    $region19: #{tpu_custom_call.1} parent=1 // pred_check_branch
      %67 = sbr.rel (0) target = $region21
    $region20: #{tpu_custom_call.1} parent=1 // pred_region
      %s69 = ssub.s32 16384, 16384
      %70 = vsyncadd [#allocation11], %s69
      %s71 = sshll.u32 [#allocation12], 4
      %s72 = int_to_ptr.vmem [resolvable:$true] %s71
      %77 = dma.hbm_to_vmem [thread:$0]  %s4, 16384, %s72, [#allocation11], 512, 512, 32
    $region21: #{tpu_custom_call.1} parent=1 // pred_fallthru
      _
    // Predicated region
    $region22: #{tpu_custom_call.1} parent=1 // pred_check
      _
    $region23: #{tpu_custom_call.1} parent=1 // pred_check_branch
      %79 = sbr.rel (0) target = $region25
    $region24: #{tpu_custom_call.1} parent=1 // pred_region
      _
    $region25: #{tpu_custom_call.1} parent=1 // pred_fallthru
      _
    // Predicated region
    $region26: #{tpu_custom_call.1} parent=1 // pred_check
      _
    $region27: #{tpu_custom_call.1} parent=1 // pred_check_branch
      %81 = sbr.rel (0) target = $region29
    $region28: #{tpu_custom_call.1} parent=1 // pred_region
      _
    $region29: #{tpu_custom_call.1} parent=1 // pred_fallthru
      _
    // Predicated region
    $region30: #{tpu_custom_call.1} parent=1 // pred_check
      _
    $region31: #{tpu_custom_call.1} parent=1 // pred_check_branch
      %83 = sbr.rel (0) target = $region33
    $region32: #{tpu_custom_call.1} parent=1 // pred_region
      %s85 = ssub.s32 2048, 2048
      %86 = vsyncadd [#allocation14], %s85
      %s87 = sshll.u32 [#allocation13], 4
      %s88 = int_to_ptr.vmem [resolvable:$true] %s87
      %93 = dma.hbm_to_vmem [thread:$0]  %s8, 2048, %s88, [#allocation14], 64, 64, 4
    $region33: #{tpu_custom_call.1} parent=1 // pred_fallthru
      _
    // Predicated region
    $region34: #{tpu_custom_call.1} parent=1 // pred_check
      _
    $region35: #{tpu_custom_call.1} parent=1 // pred_check_branch
      %95 = sbr.rel (0) target = $region37
    $region36: #{tpu_custom_call.1} parent=1 // pred_region
      _
    $region37: #{tpu_custom_call.1} parent=1 // pred_fallthru
      _
    // Predicated region
    $region38: #{tpu_custom_call.1} parent=1 // pred_check
      _
    $region39: #{tpu_custom_call.1} parent=1 // pred_check_branch
      %97 = sbr.rel (0) target = $region41
    $region40: #{tpu_custom_call.1} parent=1 // pred_region
      %98 = dma.done [#allocation5], 1024
    $region41: #{tpu_custom_call.1} parent=1 // pred_fallthru
      _
    // Predicated region
    $region42: #{tpu_custom_call.1} parent=1 // pred_check
      _
    $region43: #{tpu_custom_call.1} parent=1 // pred_check_branch
      %100 = sbr.rel (0) target = $region45
    $region44: #{tpu_custom_call.1} parent=1 // pred_region
      %101 = dma.done [#allocation8], 256
    $region45: #{tpu_custom_call.1} parent=1 // pred_fallthru
      _
    // Predicated region
    $region46: #{tpu_custom_call.1} parent=1 // pred_check
      _
    $region47: #{tpu_custom_call.1} parent=1 // pred_check_branch
      %103 = sbr.rel (0) target = $region49
    $region48: #{tpu_custom_call.1} parent=1 // pred_region
      %104 = dma.done [#allocation8], 2048
    $region49: #{tpu_custom_call.1} parent=1 // pred_fallthru
      _
    // Predicated region
    $region50: #{tpu_custom_call.1} parent=1 // pred_check
      _
    $region51: #{tpu_custom_call.1} parent=1 // pred_check_branch
      %106 = sbr.rel (0) target = $region53
    $region52: #{tpu_custom_call.1} parent=1 // pred_region
      %107 = dma.done [#allocation11], 32
    $region53: #{tpu_custom_call.1} parent=1 // pred_fallthru
      _
    // Predicated region
    $region54: #{tpu_custom_call.1} parent=1 // pred_check
      _
    $region55: #{tpu_custom_call.1} parent=1 // pred_check_branch
      %109 = sbr.rel (0) target = $region57
    $region56: #{tpu_custom_call.1} parent=1 // pred_region
      %110 = dma.done [#allocation11], 16384
    $region57: #{tpu_custom_call.1} parent=1 // pred_fallthru
      _
    // Predicated region
    $region58: #{tpu_custom_call.1} parent=1 // pred_check
      _
    $region59: #{tpu_custom_call.1} parent=1 // pred_check_branch
      %112 = sbr.rel (0) target = $region61
    $region60: #{tpu_custom_call.1} parent=1 // pred_region
      %113 = dma.done [#allocation14], 2048
    $region61: #{tpu_custom_call.1} parent=1 // pred_fallthru
      _
    // Predicated region
    $region62: #{tpu_custom_call.1} parent=1 // pred_check
      _
    $region63: #{tpu_custom_call.1} parent=1 // pred_check_branch
      %116 = sbr.rel target = $region65
    $region64: #{tpu_custom_call.1} parent=1 // pred_region
      %117 = sst [smem:[#allocation18]] [#allocation17]
      %118 = sst [smem:[#allocation19]] [#allocation16]
    $region65: #{tpu_custom_call.1} parent=1 // pred_fallthru
      _
    %120 = shalt.err (0)
    %s122 = sshll.u32 [#allocation2], 4
    %s123 = int_to_ptr.vmem [resolvable:$true] %s122
    %125 = dma.hbm_to_vmem [thread:$0]  %s6, 16384, %s123, [#allocation3]
    %v126 = vld [vmem:[#allocation7] sm:$0xff]
    %v127 = vld [vmem:[#allocation7 + $0x8] sm:$0xff]
    %v128 = vpack.c.bf16 %v127, %v126
    %v129 = vld [vmem:[#allocation9] sm:$0xff]
    %v130 = vld [vmem:[#allocation9 + $0x8] sm:$0xff]
    %v131 = vld [vmem:[#allocation9 + $0x10] sm:$0xff]
    %v132 = vld [vmem:[#allocation9 + $0x18] sm:$0xff]
    %v133 = vld [vmem:[#allocation9 + $0x20] sm:$0xff]
    %v134 = vld [vmem:[#allocation9 + $0x28] sm:$0xff]
    %v135 = vld [vmem:[#allocation9 + $0x30] sm:$0xff]
    %v136 = vld [vmem:[#allocation9 + $0x38] sm:$0xff]
    %v137 = vld [vmem:[#allocation9 + $0x40] sm:$0xff]
    %v138 = vld [vmem:[#allocation9 + $0x48] sm:$0xff]
    %v139 = vld [vmem:[#allocation9 + $0x50] sm:$0xff]
    %v140 = vld [vmem:[#allocation9 + $0x58] sm:$0xff]
    %v141 = vld [vmem:[#allocation9 + $0x60] sm:$0xff]
    %v142 = vld [vmem:[#allocation9 + $0x68] sm:$0xff]
    %v143 = vld [vmem:[#allocation9 + $0x70] sm:$0xff]
    %v144 = vld [vmem:[#allocation9 + $0x78] sm:$0xff]
    %v145 = vld [vmem:[#allocation10] sm:$0x3]
    %v147 = vlaneseq
    %v148 = vshrl.u32 %v147, 7
    %v149 = vsub.s32 0, %v148
    %v150 = vrot.slane %v145, %v149
    %v151 = vlaneseq
    %v152 = vshrl.u32 %v151, 7
    %v153 = vsub.s32 1, %v152
    %v154 = vrot.slane %v145, %v153
    %v173 = vunpack.c.l.b16 %v129
    %v174 = vunpack.c.h.b16 %v129
    %v175 = vunpack.c.l.b16 %v130
    %v176 = vunpack.c.h.b16 %v130
    %v177 = vunpack.c.l.b16 %v131
    %v178 = vunpack.c.h.b16 %v131
    %v179 = vunpack.c.l.b16 %v132
    %v180 = vunpack.c.h.b16 %v132
    %v181 = vunpack.c.l.b16 %v133
    %v182 = vunpack.c.h.b16 %v133
    %v183 = vunpack.c.l.b16 %v134
    %v184 = vunpack.c.h.b16 %v134
    %v185 = vunpack.c.l.b16 %v135
    %v186 = vunpack.c.h.b16 %v135
    %v187 = vunpack.c.l.b16 %v136
    %v188 = vunpack.c.h.b16 %v136
    %v189 = vunpack.c.l.b16 %v137
    %v190 = vunpack.c.h.b16 %v137
    %v191 = vunpack.c.l.b16 %v138
    %v192 = vunpack.c.h.b16 %v138
    %v193 = vunpack.c.l.b16 %v139
    %v194 = vunpack.c.h.b16 %v139
    %v195 = vunpack.c.l.b16 %v140
    %v196 = vunpack.c.h.b16 %v140
    %v197 = vunpack.c.l.b16 %v141
    %v198 = vunpack.c.h.b16 %v141
    %v199 = vunpack.c.l.b16 %v142
    %v200 = vunpack.c.h.b16 %v142
    %v201 = vunpack.c.l.b16 %v143
    %v202 = vunpack.c.h.b16 %v143
    %v203 = vunpack.c.l.b16 %v144
    %v204 = vunpack.c.h.b16 %v144
    %v205 = vpack.c.b16 %v175, %v173
    %v206 = vpack.c.b16 %v176, %v174
    %v207 = vpack.c.b16 %v179, %v177
    %v208 = vpack.c.b16 %v180, %v178
    %v209 = vpack.c.b16 %v183, %v181
    %v210 = vpack.c.b16 %v184, %v182
    %v211 = vpack.c.b16 %v187, %v185
    %v212 = vpack.c.b16 %v188, %v186
    %v213 = vpack.c.b16 %v191, %v189
    %v214 = vpack.c.b16 %v192, %v190
    %v215 = vpack.c.b16 %v195, %v193
    %v216 = vpack.c.b16 %v196, %v194
    %v217 = vpack.c.b16 %v199, %v197
    %v218 = vpack.c.b16 %v200, %v198
    %v219 = vpack.c.b16 %v203, %v201
    %v220 = vpack.c.b16 %v204, %v202
    %237 = vmatprep.subr.bf16.mxu0 %v220
    %238 = vmatpush1.bf16.msra.mxu0 %v219
    %239 = vmatprep.subr.bf16.mxu0 %v218
    %240 = vmatpush1.bf16.msra.mxu0 %v217
    %241 = vmatprep.subr.bf16.mxu0 %v216
    %242 = vmatpush1.bf16.msra.mxu0 %v215
    %243 = vmatprep.subr.bf16.mxu0 %v214
    %244 = vmatpush1.bf16.msra.mxu0 %v213
    %245 = vmatprep.subr.bf16.mxu0 %v212
    %246 = vmatpush1.bf16.msra.mxu0 %v211
    %247 = vmatprep.subr.bf16.mxu0 %v210
    %248 = vmatpush1.bf16.msra.mxu0 %v209
    %249 = vmatprep.subr.bf16.mxu0 %v208
    %250 = vmatpush1.bf16.msra.mxu0 %v207
    %251 = vmatprep.subr.bf16.mxu0 %v206
    %252 = vmatpush1.bf16.msra.mxu0 %v205
    %253 = vmatprep.subr.bf16.mxu0 0
    %254 = vmatpush2.bf16.msra.mxu0 0
    %255 = vmatprep.subr.bf16.mxu0 0
    %256 = vmatpush2.bf16.msra.mxu0 0
    %257 = vmatprep.subr.bf16.mxu0 0
    %258 = vmatpush2.bf16.msra.mxu0 0
    %259 = vmatprep.subr.bf16.mxu0 0
    %260 = vmatpush2.bf16.msra.mxu0 0
    %261 = vmatprep.subr.bf16.mxu0 0
    %262 = vmatpush2.bf16.msra.mxu0 0
    %263 = vmatprep.subr.bf16.mxu0 0
    %264 = vmatpush2.bf16.msra.mxu0 0
    %265 = vmatprep.subr.bf16.mxu0 0
    %266 = vmatpush2.bf16.msra.mxu0 0
    %267 = vmatprep.subr.bf16.mxu0 0
    %268 = vmatpush2.bf16.msra.mxu0 0
    %269 = vmatprep.mubr.bf16.mxu0 0
    %270 = vmatmul.mubr.bf16.gmra.mxu0 %v128
    %v271 = vpop.f32.mrf.mxu0
    %v272 = vadd.f32 %v150, %v271
    %v273 = vpop.f32.mrf.mxu0
    %v274 = vadd.f32 %v154, %v273
    %v275 = vpop.f32.mrf.mxu0
    %v276 = vadd.f32 %v150, %v275
    %v277 = vpop.f32.mrf.mxu0
    %v278 = vadd.f32 %v154, %v277
    %279 = vdwg.mxu0
    %vm280 = vcmp.gt.f32.partialorder %v272, 0.0
    %vm281 = vcmp.gt.f32.partialorder %v274, 0.0
    %vm282 = vcmp.gt.f32.partialorder %v276, 0.0
    %vm283 = vcmp.gt.f32.partialorder %v278, 0.0
    %v284 = vmul.f32 %v272, 0.2
    %v285 = vmul.f32 %v274, 0.2
    %v286 = vmul.f32 %v276, 0.2
    %v287 = vmul.f32 %v278, 0.2
    %v288 = vsel %vm280, %v272, %v284
    %v289 = vsel %vm281, %v274, %v285
    %v290 = vsel %vm282, %v276, %v286
    %v291 = vsel %vm283, %v278, %v287
    %v292 = vpack.c.bf16 %v290, %v288
    %v293 = vpack.c.bf16 %v291, %v289
    %v294 = vld [vmem:[#allocation12] sm:$0xff]
    %v295 = vld [vmem:[#allocation12 + $0x8] sm:$0xff]
    %v296 = vld [vmem:[#allocation12 + $0x10] sm:$0xff]
    %v297 = vld [vmem:[#allocation12 + $0x18] sm:$0xff]
    %v298 = vld [vmem:[#allocation12 + $0x20] sm:$0xff]
    %v299 = vld [vmem:[#allocation12 + $0x28] sm:$0xff]
    %v300 = vld [vmem:[#allocation12 + $0x30] sm:$0xff]
    %v301 = vld [vmem:[#allocation12 + $0x38] sm:$0xff]
    %v302 = vld [vmem:[#allocation12 + $0x40] sm:$0xff]
    %v303 = vld [vmem:[#allocation12 + $0x48] sm:$0xff]
    %v304 = vld [vmem:[#allocation12 + $0x50] sm:$0xff]
    %v305 = vld [vmem:[#allocation12 + $0x58] sm:$0xff]
    %v306 = vld [vmem:[#allocation12 + $0x60] sm:$0xff]
    %v307 = vld [vmem:[#allocation12 + $0x68] sm:$0xff]
    %v308 = vld [vmem:[#allocation12 + $0x70] sm:$0xff]
    %v309 = vld [vmem:[#allocation12 + $0x78] sm:$0xff]
    %v310 = vld [vmem:[#allocation12 + $0x80] sm:$0xff]
    %v311 = vld [vmem:[#allocation12 + $0x88] sm:$0xff]
    %v312 = vld [vmem:[#allocation12 + $0x90] sm:$0xff]
    %v313 = vld [vmem:[#allocation12 + $0x98] sm:$0xff]
    %v314 = vld [vmem:[#allocation12 + $0xa0] sm:$0xff]
    %v315 = vld [vmem:[#allocation12 + $0xa8] sm:$0xff]
    %v316 = vld [vmem:[#allocation12 + $0xb0] sm:$0xff]
    %v317 = vld [vmem:[#allocation12 + $0xb8] sm:$0xff]
    %v318 = vld [vmem:[#allocation12 + $0xc0] sm:$0xff]
    %v319 = vld [vmem:[#allocation12 + $0xc8] sm:$0xff]
    %v320 = vld [vmem:[#allocation12 + $0xd0] sm:$0xff]
    %v321 = vld [vmem:[#allocation12 + $0xd8] sm:$0xff]
    %v322 = vld [vmem:[#allocation12 + $0xe0] sm:$0xff]
    %v323 = vld [vmem:[#allocation12 + $0xe8] sm:$0xff]
    %v324 = vld [vmem:[#allocation12 + $0xf0] sm:$0xff]
    %v325 = vld [vmem:[#allocation12 + $0xf8] sm:$0xff]
    %v326 = vld [vmem:[#allocation12 + $0x100] sm:$0xff]
    %v327 = vld [vmem:[#allocation12 + $0x108] sm:$0xff]
    %v328 = vld [vmem:[#allocation12 + $0x110] sm:$0xff]
    %v329 = vld [vmem:[#allocation12 + $0x118] sm:$0xff]
    %v330 = vld [vmem:[#allocation12 + $0x120] sm:$0xff]
    %v331 = vld [vmem:[#allocation12 + $0x128] sm:$0xff]
    %v332 = vld [vmem:[#allocation12 + $0x130] sm:$0xff]
    %v333 = vld [vmem:[#allocation12 + $0x138] sm:$0xff]
    %v334 = vld [vmem:[#allocation12 + $0x140] sm:$0xff]
    %v335 = vld [vmem:[#allocation12 + $0x148] sm:$0xff]
    %v336 = vld [vmem:[#allocation12 + $0x150] sm:$0xff]
    %v337 = vld [vmem:[#allocation12 + $0x158] sm:$0xff]
    %v338 = vld [vmem:[#allocation12 + $0x160] sm:$0xff]
    %v339 = vld [vmem:[#allocation12 + $0x168] sm:$0xff]
    %v340 = vld [vmem:[#allocation12 + $0x170] sm:$0xff]
    %v341 = vld [vmem:[#allocation12 + $0x178] sm:$0xff]
    %v342 = vld [vmem:[#allocation12 + $0x180] sm:$0xff]
    %v343 = vld [vmem:[#allocation12 + $0x188] sm:$0xff]
    %v344 = vld [vmem:[#allocation12 + $0x190] sm:$0xff]
    %v345 = vld [vmem:[#allocation12 + $0x198] sm:$0xff]
    %v346 = vld [vmem:[#allocation12 + $0x1a0] sm:$0xff]
    %v347 = vld [vmem:[#allocation12 + $0x1a8] sm:$0xff]
    %v348 = vld [vmem:[#allocation12 + $0x1b0] sm:$0xff]
    %v349 = vld [vmem:[#allocation12 + $0x1b8] sm:$0xff]
    %v350 = vld [vmem:[#allocation12 + $0x1c0] sm:$0xff]
    %v351 = vld [vmem:[#allocation12 + $0x1c8] sm:$0xff]
    %v352 = vld [vmem:[#allocation12 + $0x1d0] sm:$0xff]
    %v353 = vld [vmem:[#allocation12 + $0x1d8] sm:$0xff]
    %v354 = vld [vmem:[#allocation12 + $0x1e0] sm:$0xff]
    %v355 = vld [vmem:[#allocation12 + $0x1e8] sm:$0xff]
    %v356 = vld [vmem:[#allocation12 + $0x1f0] sm:$0xff]
    %v357 = vld [vmem:[#allocation12 + $0x1f8] sm:$0xff]
    %v358 = vld [vmem:[#allocation12 + $0x200] sm:$0xff]
    %v359 = vld [vmem:[#allocation12 + $0x208] sm:$0xff]
    %v360 = vld [vmem:[#allocation12 + $0x210] sm:$0xff]
    %v361 = vld [vmem:[#allocation12 + $0x218] sm:$0xff]
    %v362 = vld [vmem:[#allocation12 + $0x220] sm:$0xff]
    %v363 = vld [vmem:[#allocation12 + $0x228] sm:$0xff]
    %v364 = vld [vmem:[#allocation12 + $0x230] sm:$0xff]
    %v365 = vld [vmem:[#allocation12 + $0x238] sm:$0xff]
    %v366 = vld [vmem:[#allocation12 + $0x240] sm:$0xff]
    %v367 = vld [vmem:[#allocation12 + $0x248] sm:$0xff]
    %v368 = vld [vmem:[#allocation12 + $0x250] sm:$0xff]
    %v369 = vld [vmem:[#allocation12 + $0x258] sm:$0xff]
    %v370 = vld [vmem:[#allocation12 + $0x260] sm:$0xff]
    %v371 = vld [vmem:[#allocation12 + $0x268] sm:$0xff]
    %v372 = vld [vmem:[#allocation12 + $0x270] sm:$0xff]
    %v373 = vld [vmem:[#allocation12 + $0x278] sm:$0xff]
    %v374 = vld [vmem:[#allocation12 + $0x280] sm:$0xff]
    %v375 = vld [vmem:[#allocation12 + $0x288] sm:$0xff]
    %v376 = vld [vmem:[#allocation12 + $0x290] sm:$0xff]
    %v377 = vld [vmem:[#allocation12 + $0x298] sm:$0xff]
    %v378 = vld [vmem:[#allocation12 + $0x2a0] sm:$0xff]
    %v379 = vld [vmem:[#allocation12 + $0x2a8] sm:$0xff]
    %v380 = vld [vmem:[#allocation12 + $0x2b0] sm:$0xff]
    %v381 = vld [vmem:[#allocation12 + $0x2b8] sm:$0xff]
    %v382 = vld [vmem:[#allocation12 + $0x2c0] sm:$0xff]
    %v383 = vld [vmem:[#allocation12 + $0x2c8] sm:$0xff]
    %v384 = vld [vmem:[#allocation12 + $0x2d0] sm:$0xff]
    %v385 = vld [vmem:[#allocation12 + $0x2d8] sm:$0xff]
    %v386 = vld [vmem:[#allocation12 + $0x2e0] sm:$0xff]
    %v387 = vld [vmem:[#allocation12 + $0x2e8] sm:$0xff]
    %v388 = vld [vmem:[#allocation12 + $0x2f0] sm:$0xff]
    %v389 = vld [vmem:[#allocation12 + $0x2f8] sm:$0xff]
    %v390 = vld [vmem:[#allocation12 + $0x300] sm:$0xff]
    %v391 = vld [vmem:[#allocation12 + $0x308] sm:$0xff]
    %v392 = vld [vmem:[#allocation12 + $0x310] sm:$0xff]
    %v393 = vld [vmem:[#allocation12 + $0x318] sm:$0xff]
    %v394 = vld [vmem:[#allocation12 + $0x320] sm:$0xff]
    %v395 = vld [vmem:[#allocation12 + $0x328] sm:$0xff]
    %v396 = vld [vmem:[#allocation12 + $0x330] sm:$0xff]
    %v397 = vld [vmem:[#allocation12 + $0x338] sm:$0xff]
    %v398 = vld [vmem:[#allocation12 + $0x340] sm:$0xff]
    %v399 = vld [vmem:[#allocation12 + $0x348] sm:$0xff]
    %v400 = vld [vmem:[#allocation12 + $0x350] sm:$0xff]
    %v401 = vld [vmem:[#allocation12 + $0x358] sm:$0xff]
    %v402 = vld [vmem:[#allocation12 + $0x360] sm:$0xff]
    %v403 = vld [vmem:[#allocation12 + $0x368] sm:$0xff]
    %v404 = vld [vmem:[#allocation12 + $0x370] sm:$0xff]
    %v405 = vld [vmem:[#allocation12 + $0x378] sm:$0xff]
    %v406 = vld [vmem:[#allocation12 + $0x380] sm:$0xff]
    %v407 = vld [vmem:[#allocation12 + $0x388] sm:$0xff]
    %v408 = vld [vmem:[#allocation12 + $0x390] sm:$0xff]
    %v409 = vld [vmem:[#allocation12 + $0x398] sm:$0xff]
    %v410 = vld [vmem:[#allocation12 + $0x3a0] sm:$0xff]
    %v411 = vld [vmem:[#allocation12 + $0x3a8] sm:$0xff]
    %v412 = vld [vmem:[#allocation12 + $0x3b0] sm:$0xff]
    %v413 = vld [vmem:[#allocation12 + $0x3b8] sm:$0xff]
    %v414 = vld [vmem:[#allocation12 + $0x3c0] sm:$0xff]
    %v415 = vld [vmem:[#allocation12 + $0x3c8] sm:$0xff]
    %v416 = vld [vmem:[#allocation12 + $0x3d0] sm:$0xff]
    %v417 = vld [vmem:[#allocation12 + $0x3d8] sm:$0xff]
    %v418 = vld [vmem:[#allocation12 + $0x3e0] sm:$0xff]
    %v419 = vld [vmem:[#allocation12 + $0x3e8] sm:$0xff]
    %v420 = vld [vmem:[#allocation12 + $0x3f0] sm:$0xff]
    %v421 = vld [vmem:[#allocation12 + $0x3f8] sm:$0xff]
    %v422 = vld [vmem:[%s5] sm:$0xff]
    %v424 = vlaneseq
    %v425 = vshrl.u32 %v424, 7
    %v426 = vsub.s32 0, %v425
    %v427 = vrot.slane %v422, %v426
    %v428 = vlaneseq
    %v429 = vshrl.u32 %v428, 7
    %v430 = vsub.s32 1, %v429
    %v431 = vrot.slane %v422, %v430
    %v432 = vlaneseq
    %v433 = vshrl.u32 %v432, 7
    %v434 = vsub.s32 2, %v433
    %v435 = vrot.slane %v422, %v434
    %v436 = vlaneseq
    %v437 = vshrl.u32 %v436, 7
    %v438 = vsub.s32 3, %v437
    %v439 = vrot.slane %v422, %v438
    %v440 = vlaneseq
    %v441 = vshrl.u32 %v440, 7
    %v442 = vsub.s32 4, %v441
    %v443 = vrot.slane %v422, %v442
    %v444 = vlaneseq
    %v445 = vshrl.u32 %v444, 7
    %v446 = vsub.s32 5, %v445
    %v447 = vrot.slane %v422, %v446
    %v448 = vlaneseq
    %v449 = vshrl.u32 %v448, 7
    %v450 = vsub.s32 6, %v449
    %v451 = vrot.slane %v422, %v450
    %v452 = vlaneseq
    %v453 = vshrl.u32 %v452, 7
    %v454 = vsub.s32 7, %v453
    %v455 = vrot.slane %v422, %v454
    %v592 = vunpack.c.l.b16 %v294
    %v593 = vunpack.c.h.b16 %v294
    %v594 = vunpack.c.l.b16 %v295
    %v595 = vunpack.c.h.b16 %v295
    %v596 = vunpack.c.l.b16 %v296
    %v597 = vunpack.c.h.b16 %v296
    %v598 = vunpack.c.l.b16 %v297
    %v599 = vunpack.c.h.b16 %v297
    %v600 = vunpack.c.l.b16 %v298
    %v601 = vunpack.c.h.b16 %v298
    %v602 = vunpack.c.l.b16 %v299
    %v603 = vunpack.c.h.b16 %v299
    %v604 = vunpack.c.l.b16 %v300
    %v605 = vunpack.c.h.b16 %v300
    %v606 = vunpack.c.l.b16 %v301
    %v607 = vunpack.c.h.b16 %v301
    %v608 = vunpack.c.l.b16 %v302
    %v609 = vunpack.c.h.b16 %v302
    %v610 = vunpack.c.l.b16 %v303
    %v611 = vunpack.c.h.b16 %v303
    %v612 = vunpack.c.l.b16 %v304
    %v613 = vunpack.c.h.b16 %v304
    %v614 = vunpack.c.l.b16 %v305
    %v615 = vunpack.c.h.b16 %v305
    %v616 = vunpack.c.l.b16 %v306
    %v617 = vunpack.c.h.b16 %v306
    %v618 = vunpack.c.l.b16 %v307
    %v619 = vunpack.c.h.b16 %v307
    %v620 = vunpack.c.l.b16 %v308
    %v621 = vunpack.c.h.b16 %v308
    %v622 = vunpack.c.l.b16 %v309
    %v623 = vunpack.c.h.b16 %v309
    %v624 = vunpack.c.l.b16 %v310
    %v625 = vunpack.c.h.b16 %v310
    %v626 = vunpack.c.l.b16 %v311
    %v627 = vunpack.c.h.b16 %v311
    %v628 = vunpack.c.l.b16 %v312
    %v629 = vunpack.c.h.b16 %v312
    %v630 = vunpack.c.l.b16 %v313
    %v631 = vunpack.c.h.b16 %v313
    %v632 = vunpack.c.l.b16 %v314
    %v633 = vunpack.c.h.b16 %v314
    %v634 = vunpack.c.l.b16 %v315
    %v635 = vunpack.c.h.b16 %v315
    %v636 = vunpack.c.l.b16 %v316
    %v637 = vunpack.c.h.b16 %v316
    %v638 = vunpack.c.l.b16 %v317
    %v639 = vunpack.c.h.b16 %v317
    %v640 = vunpack.c.l.b16 %v318
    %v641 = vunpack.c.h.b16 %v318
    %v642 = vunpack.c.l.b16 %v319
    %v643 = vunpack.c.h.b16 %v319
    %v644 = vunpack.c.l.b16 %v320
    %v645 = vunpack.c.h.b16 %v320
    %v646 = vunpack.c.l.b16 %v321
    %v647 = vunpack.c.h.b16 %v321
    %v648 = vunpack.c.l.b16 %v322
    %v649 = vunpack.c.h.b16 %v322
    %v650 = vunpack.c.l.b16 %v323
    %v651 = vunpack.c.h.b16 %v323
    %v652 = vunpack.c.l.b16 %v324
    %v653 = vunpack.c.h.b16 %v324
    %v654 = vunpack.c.l.b16 %v325
    %v655 = vunpack.c.h.b16 %v325
    %v656 = vunpack.c.l.b16 %v326
    %v657 = vunpack.c.h.b16 %v326
    %v658 = vunpack.c.l.b16 %v327
    %v659 = vunpack.c.h.b16 %v327
    %v660 = vunpack.c.l.b16 %v328
    %v661 = vunpack.c.h.b16 %v328
    %v662 = vunpack.c.l.b16 %v329
    %v663 = vunpack.c.h.b16 %v329
    %v664 = vunpack.c.l.b16 %v330
    %v665 = vunpack.c.h.b16 %v330
    %v666 = vunpack.c.l.b16 %v331
    %v667 = vunpack.c.h.b16 %v331
    %v668 = vunpack.c.l.b16 %v332
    %v669 = vunpack.c.h.b16 %v332
    %v670 = vunpack.c.l.b16 %v333
    %v671 = vunpack.c.h.b16 %v333
    %v672 = vunpack.c.l.b16 %v334
    %v673 = vunpack.c.h.b16 %v334
    %v674 = vunpack.c.l.b16 %v335
    %v675 = vunpack.c.h.b16 %v335
    %v676 = vunpack.c.l.b16 %v336
    %v677 = vunpack.c.h.b16 %v336
    %v678 = vunpack.c.l.b16 %v337
    %v679 = vunpack.c.h.b16 %v337
    %v680 = vunpack.c.l.b16 %v338
    %v681 = vunpack.c.h.b16 %v338
    %v682 = vunpack.c.l.b16 %v339
    %v683 = vunpack.c.h.b16 %v339
    %v684 = vunpack.c.l.b16 %v340
    %v685 = vunpack.c.h.b16 %v340
    %v686 = vunpack.c.l.b16 %v341
    %v687 = vunpack.c.h.b16 %v341
    %v688 = vunpack.c.l.b16 %v342
    %v689 = vunpack.c.h.b16 %v342
    %v690 = vunpack.c.l.b16 %v343
    %v691 = vunpack.c.h.b16 %v343
    %v692 = vunpack.c.l.b16 %v344
    %v693 = vunpack.c.h.b16 %v344
    %v694 = vunpack.c.l.b16 %v345
    %v695 = vunpack.c.h.b16 %v345
    %v696 = vunpack.c.l.b16 %v346
    %v697 = vunpack.c.h.b16 %v346
    %v698 = vunpack.c.l.b16 %v347
    %v699 = vunpack.c.h.b16 %v347
    %v700 = vunpack.c.l.b16 %v348
    %v701 = vunpack.c.h.b16 %v348
    %v702 = vunpack.c.l.b16 %v349
    %v703 = vunpack.c.h.b16 %v349
    %v704 = vunpack.c.l.b16 %v350
    %v705 = vunpack.c.h.b16 %v350
    %v706 = vunpack.c.l.b16 %v351
    %v707 = vunpack.c.h.b16 %v351
    %v708 = vunpack.c.l.b16 %v352
    %v709 = vunpack.c.h.b16 %v352
    %v710 = vunpack.c.l.b16 %v353
    %v711 = vunpack.c.h.b16 %v353
    %v712 = vunpack.c.l.b16 %v354
    %v713 = vunpack.c.h.b16 %v354
    %v714 = vunpack.c.l.b16 %v355
    %v715 = vunpack.c.h.b16 %v355
    %v716 = vunpack.c.l.b16 %v356
    %v717 = vunpack.c.h.b16 %v356
    %v718 = vunpack.c.l.b16 %v357
    %v719 = vunpack.c.h.b16 %v357
    %v720 = vunpack.c.l.b16 %v358
    %v721 = vunpack.c.h.b16 %v358
    %v722 = vunpack.c.l.b16 %v359
    %v723 = vunpack.c.h.b16 %v359
    %v724 = vunpack.c.l.b16 %v360
    %v725 = vunpack.c.h.b16 %v360
    %v726 = vunpack.c.l.b16 %v361
    %v727 = vunpack.c.h.b16 %v361
    %v728 = vunpack.c.l.b16 %v362
    %v729 = vunpack.c.h.b16 %v362
    %v730 = vunpack.c.l.b16 %v363
    %v731 = vunpack.c.h.b16 %v363
    %v732 = vunpack.c.l.b16 %v364
    %v733 = vunpack.c.h.b16 %v364
    %v734 = vunpack.c.l.b16 %v365
    %v735 = vunpack.c.h.b16 %v365
    %v736 = vunpack.c.l.b16 %v366
    %v737 = vunpack.c.h.b16 %v366
    %v738 = vunpack.c.l.b16 %v367
    %v739 = vunpack.c.h.b16 %v367
    %v740 = vunpack.c.l.b16 %v368
    %v741 = vunpack.c.h.b16 %v368
    %v742 = vunpack.c.l.b16 %v369
    %v743 = vunpack.c.h.b16 %v369
    %v744 = vunpack.c.l.b16 %v370
    %v745 = vunpack.c.h.b16 %v370
    %v746 = vunpack.c.l.b16 %v371
    %v747 = vunpack.c.h.b16 %v371
    %v748 = vunpack.c.l.b16 %v372
    %v749 = vunpack.c.h.b16 %v372
    %v750 = vunpack.c.l.b16 %v373
    %v751 = vunpack.c.h.b16 %v373
    %v752 = vunpack.c.l.b16 %v374
    %v753 = vunpack.c.h.b16 %v374
    %v754 = vunpack.c.l.b16 %v375
    %v755 = vunpack.c.h.b16 %v375
    %v756 = vunpack.c.l.b16 %v376
    %v757 = vunpack.c.h.b16 %v376
    %v758 = vunpack.c.l.b16 %v377
    %v759 = vunpack.c.h.b16 %v377
    %v760 = vunpack.c.l.b16 %v378
    %v761 = vunpack.c.h.b16 %v378
    %v762 = vunpack.c.l.b16 %v379
    %v763 = vunpack.c.h.b16 %v379
    %v764 = vunpack.c.l.b16 %v380
    %v765 = vunpack.c.h.b16 %v380
    %v766 = vunpack.c.l.b16 %v381
    %v767 = vunpack.c.h.b16 %v381
    %v768 = vunpack.c.l.b16 %v382
    %v769 = vunpack.c.h.b16 %v382
    %v770 = vunpack.c.l.b16 %v383
    %v771 = vunpack.c.h.b16 %v383
    %v772 = vunpack.c.l.b16 %v384
    %v773 = vunpack.c.h.b16 %v384
    %v774 = vunpack.c.l.b16 %v385
    %v775 = vunpack.c.h.b16 %v385
    %v776 = vunpack.c.l.b16 %v386
    %v777 = vunpack.c.h.b16 %v386
    %v778 = vunpack.c.l.b16 %v387
    %v779 = vunpack.c.h.b16 %v387
    %v780 = vunpack.c.l.b16 %v388
    %v781 = vunpack.c.h.b16 %v388
    %v782 = vunpack.c.l.b16 %v389
    %v783 = vunpack.c.h.b16 %v389
    %v784 = vunpack.c.l.b16 %v390
    %v785 = vunpack.c.h.b16 %v390
    %v786 = vunpack.c.l.b16 %v391
    %v787 = vunpack.c.h.b16 %v391
    %v788 = vunpack.c.l.b16 %v392
    %v789 = vunpack.c.h.b16 %v392
    %v790 = vunpack.c.l.b16 %v393
    %v791 = vunpack.c.h.b16 %v393
    %v792 = vunpack.c.l.b16 %v394
    %v793 = vunpack.c.h.b16 %v394
    %v794 = vunpack.c.l.b16 %v395
    %v795 = vunpack.c.h.b16 %v395
    %v796 = vunpack.c.l.b16 %v396
    %v797 = vunpack.c.h.b16 %v396
    %v798 = vunpack.c.l.b16 %v397
    %v799 = vunpack.c.h.b16 %v397
    %v800 = vunpack.c.l.b16 %v398
    %v801 = vunpack.c.h.b16 %v398
    %v802 = vunpack.c.l.b16 %v399
    %v803 = vunpack.c.h.b16 %v399
    %v804 = vunpack.c.l.b16 %v400
    %v805 = vunpack.c.h.b16 %v400
    %v806 = vunpack.c.l.b16 %v401
    %v807 = vunpack.c.h.b16 %v401
    %v808 = vunpack.c.l.b16 %v402
    %v809 = vunpack.c.h.b16 %v402
    %v810 = vunpack.c.l.b16 %v403
    %v811 = vunpack.c.h.b16 %v403
    %v812 = vunpack.c.l.b16 %v404
    %v813 = vunpack.c.h.b16 %v404
    %v814 = vunpack.c.l.b16 %v405
    %v815 = vunpack.c.h.b16 %v405
    %v816 = vunpack.c.l.b16 %v406
    %v817 = vunpack.c.h.b16 %v406
    %v818 = vunpack.c.l.b16 %v407
    %v819 = vunpack.c.h.b16 %v407
    %v820 = vunpack.c.l.b16 %v408
    %v821 = vunpack.c.h.b16 %v408
    %v822 = vunpack.c.l.b16 %v409
    %v823 = vunpack.c.h.b16 %v409
    %v824 = vunpack.c.l.b16 %v410
    %v825 = vunpack.c.h.b16 %v410
    %v826 = vunpack.c.l.b16 %v411
    %v827 = vunpack.c.h.b16 %v411
    %v828 = vunpack.c.l.b16 %v412
    %v829 = vunpack.c.h.b16 %v412
    %v830 = vunpack.c.l.b16 %v413
    %v831 = vunpack.c.h.b16 %v413
    %v832 = vunpack.c.l.b16 %v414
    %v833 = vunpack.c.h.b16 %v414
    %v834 = vunpack.c.l.b16 %v415
    %v835 = vunpack.c.h.b16 %v415
    %v836 = vunpack.c.l.b16 %v416
    %v837 = vunpack.c.h.b16 %v416
    %v838 = vunpack.c.l.b16 %v417
    %v839 = vunpack.c.h.b16 %v417
    %v840 = vunpack.c.l.b16 %v418
    %v841 = vunpack.c.h.b16 %v418
    %v842 = vunpack.c.l.b16 %v419
    %v843 = vunpack.c.h.b16 %v419
    %v844 = vunpack.c.l.b16 %v420
    %v845 = vunpack.c.h.b16 %v420
    %v846 = vunpack.c.l.b16 %v421
    %v847 = vunpack.c.h.b16 %v421
    %v848 = vpack.c.b16 %v600, %v592
    %v849 = vpack.c.b16 %v601, %v593
    %v850 = vpack.c.b16 %v602, %v594
    %v851 = vpack.c.b16 %v603, %v595
    %v852 = vpack.c.b16 %v604, %v596
    %v853 = vpack.c.b16 %v605, %v597
    %v854 = vpack.c.b16 %v606, %v598
    %v855 = vpack.c.b16 %v607, %v599
    %v856 = vpack.c.b16 %v616, %v608
    %v857 = vpack.c.b16 %v617, %v609
    %v858 = vpack.c.b16 %v618, %v610
    %v859 = vpack.c.b16 %v619, %v611
    %v860 = vpack.c.b16 %v620, %v612
    %v861 = vpack.c.b16 %v621, %v613
    %v862 = vpack.c.b16 %v622, %v614
    %v863 = vpack.c.b16 %v623, %v615
    %v864 = vpack.c.b16 %v632, %v624
    %v865 = vpack.c.b16 %v633, %v625
    %v866 = vpack.c.b16 %v634, %v626
    %v867 = vpack.c.b16 %v635, %v627
    %v868 = vpack.c.b16 %v636, %v628
    %v869 = vpack.c.b16 %v637, %v629
    %v870 = vpack.c.b16 %v638, %v630
    %v871 = vpack.c.b16 %v639, %v631
    %v872 = vpack.c.b16 %v648, %v640
    %v873 = vpack.c.b16 %v649, %v641
    %v874 = vpack.c.b16 %v650, %v642
    %v875 = vpack.c.b16 %v651, %v643
    %v876 = vpack.c.b16 %v652, %v644
    %v877 = vpack.c.b16 %v653, %v645
    %v878 = vpack.c.b16 %v654, %v646
    %v879 = vpack.c.b16 %v655, %v647
    %v880 = vpack.c.b16 %v664, %v656
    %v881 = vpack.c.b16 %v665, %v657
    %v882 = vpack.c.b16 %v666, %v658
    %v883 = vpack.c.b16 %v667, %v659
    %v884 = vpack.c.b16 %v668, %v660
    %v885 = vpack.c.b16 %v669, %v661
    %v886 = vpack.c.b16 %v670, %v662
    %v887 = vpack.c.b16 %v671, %v663
    %v888 = vpack.c.b16 %v680, %v672
    %v889 = vpack.c.b16 %v681, %v673
    %v890 = vpack.c.b16 %v682, %v674
    %v891 = vpack.c.b16 %v683, %v675
    %v892 = vpack.c.b16 %v684, %v676
    %v893 = vpack.c.b16 %v685, %v677
    %v894 = vpack.c.b16 %v686, %v678
    %v895 = vpack.c.b16 %v687, %v679
    %v896 = vpack.c.b16 %v696, %v688
    %v897 = vpack.c.b16 %v697, %v689
    %v898 = vpack.c.b16 %v698, %v690
    %v899 = vpack.c.b16 %v699, %v691
    %v900 = vpack.c.b16 %v700, %v692
    %v901 = vpack.c.b16 %v701, %v693
    %v902 = vpack.c.b16 %v702, %v694
    %v903 = vpack.c.b16 %v703, %v695
    %v904 = vpack.c.b16 %v712, %v704
    %v905 = vpack.c.b16 %v713, %v705
    %v906 = vpack.c.b16 %v714, %v706
    %v907 = vpack.c.b16 %v715, %v707
    %v908 = vpack.c.b16 %v716, %v708
    %v909 = vpack.c.b16 %v717, %v709
    %v910 = vpack.c.b16 %v718, %v710
    %v911 = vpack.c.b16 %v719, %v711
    %v912 = vpack.c.b16 %v728, %v720
    %v913 = vpack.c.b16 %v729, %v721
    %v914 = vpack.c.b16 %v730, %v722
    %v915 = vpack.c.b16 %v731, %v723
    %v916 = vpack.c.b16 %v732, %v724
    %v917 = vpack.c.b16 %v733, %v725
    %v918 = vpack.c.b16 %v734, %v726
    %v919 = vpack.c.b16 %v735, %v727
    %v920 = vpack.c.b16 %v744, %v736
    %v921 = vpack.c.b16 %v745, %v737
    %v922 = vpack.c.b16 %v746, %v738
    %v923 = vpack.c.b16 %v747, %v739
    %v924 = vpack.c.b16 %v748, %v740
    %v925 = vpack.c.b16 %v749, %v741
    %v926 = vpack.c.b16 %v750, %v742
    %v927 = vpack.c.b16 %v751, %v743
    %v928 = vpack.c.b16 %v760, %v752
    %v929 = vpack.c.b16 %v761, %v753
    %v930 = vpack.c.b16 %v762, %v754
    %v931 = vpack.c.b16 %v763, %v755
    %v932 = vpack.c.b16 %v764, %v756
    %v933 = vpack.c.b16 %v765, %v757
    %v934 = vpack.c.b16 %v766, %v758
    %v935 = vpack.c.b16 %v767, %v759
    %v936 = vpack.c.b16 %v776, %v768
    %v937 = vpack.c.b16 %v777, %v769
    %v938 = vpack.c.b16 %v778, %v770
    %v939 = vpack.c.b16 %v779, %v771
    %v940 = vpack.c.b16 %v780, %v772
    %v941 = vpack.c.b16 %v781, %v773
    %v942 = vpack.c.b16 %v782, %v774
    %v943 = vpack.c.b16 %v783, %v775
    %v944 = vpack.c.b16 %v792, %v784
    %v945 = vpack.c.b16 %v793, %v785
    %v946 = vpack.c.b16 %v794, %v786
    %v947 = vpack.c.b16 %v795, %v787
    %v948 = vpack.c.b16 %v796, %v788
    %v949 = vpack.c.b16 %v797, %v789
    %v950 = vpack.c.b16 %v798, %v790
    %v951 = vpack.c.b16 %v799, %v791
    %v952 = vpack.c.b16 %v808, %v800
    %v953 = vpack.c.b16 %v809, %v801
    %v954 = vpack.c.b16 %v810, %v802
    %v955 = vpack.c.b16 %v811, %v803
    %v956 = vpack.c.b16 %v812, %v804
    %v957 = vpack.c.b16 %v813, %v805
    %v958 = vpack.c.b16 %v814, %v806
    %v959 = vpack.c.b16 %v815, %v807
    %v960 = vpack.c.b16 %v824, %v816
    %v961 = vpack.c.b16 %v825, %v817
    %v962 = vpack.c.b16 %v826, %v818
    %v963 = vpack.c.b16 %v827, %v819
    %v964 = vpack.c.b16 %v828, %v820
    %v965 = vpack.c.b16 %v829, %v821
    %v966 = vpack.c.b16 %v830, %v822
    %v967 = vpack.c.b16 %v831, %v823
    %v968 = vpack.c.b16 %v840, %v832
    %v969 = vpack.c.b16 %v841, %v833
    %v970 = vpack.c.b16 %v842, %v834
    %v971 = vpack.c.b16 %v843, %v835
    %v972 = vpack.c.b16 %v844, %v836
    %v973 = vpack.c.b16 %v845, %v837
    %v974 = vpack.c.b16 %v846, %v838
    %v975 = vpack.c.b16 %v847, %v839
    %1104 = vmatprep.subr.bf16.mxu0 %v905
    %1105 = vmatpush1.bf16.msra.mxu0 %v904
    %1106 = vmatprep.subr.bf16.mxu0 %v897
    %1107 = vmatpush1.bf16.msra.mxu0 %v896
    %1108 = vmatprep.subr.bf16.mxu0 %v889
    %1109 = vmatpush1.bf16.msra.mxu0 %v888
    %1110 = vmatprep.subr.bf16.mxu0 %v881
    %1111 = vmatpush1.bf16.msra.mxu0 %v880
    %1112 = vmatprep.subr.bf16.mxu0 %v873
    %1113 = vmatpush1.bf16.msra.mxu0 %v872
    %1114 = vmatprep.subr.bf16.mxu0 %v865
    %1115 = vmatpush1.bf16.msra.mxu0 %v864
    %1116 = vmatprep.subr.bf16.mxu0 %v857
    %1117 = vmatpush1.bf16.msra.mxu0 %v856
    %1118 = vmatprep.subr.bf16.mxu0 %v849
    %1119 = vmatpush1.bf16.msra.mxu0 %v848
    %1120 = vmatprep.subr.bf16.mxu0 %v969
    %1121 = vmatpush2.bf16.msra.mxu0 %v968
    %1122 = vmatprep.subr.bf16.mxu0 %v961
    %1123 = vmatpush2.bf16.msra.mxu0 %v960
    %1124 = vmatprep.subr.bf16.mxu0 %v953
    %1125 = vmatpush2.bf16.msra.mxu0 %v952
    %1126 = vmatprep.subr.bf16.mxu0 %v945
    %1127 = vmatpush2.bf16.msra.mxu0 %v944
    %1128 = vmatprep.subr.bf16.mxu0 %v937
    %1129 = vmatpush2.bf16.msra.mxu0 %v936
    %1130 = vmatprep.subr.bf16.mxu0 %v929
    %1131 = vmatpush2.bf16.msra.mxu0 %v928
    %1132 = vmatprep.subr.bf16.mxu0 %v921
    %1133 = vmatpush2.bf16.msra.mxu0 %v920
    %1134 = vmatprep.subr.bf16.mxu0 %v913
    %1135 = vmatpush2.bf16.msra.mxu0 %v912
    %1136 = vmatprep.mubr.bf16.mxu0 %v293
    %1137 = vmatmul.mubr.bf16.gmra.mxu0 %v292
    %v1138 = vpop.f32.mrf.mxu0
    %v1139 = vadd.f32 %v427, %v1138
    %v1140 = vpop.f32.mrf.mxu0
    %v1141 = vadd.f32 %v431, %v1140
    %v1142 = vpop.f32.mrf.mxu0
    %v1143 = vadd.f32 %v427, %v1142
    %v1144 = vpop.f32.mrf.mxu0
    %v1145 = vadd.f32 %v431, %v1144
    %1146 = vdwg.mxu0
    %1147 = vmatprep.subr.bf16.mxu0 %v907
    %1148 = vmatpush1.bf16.msra.mxu0 %v906
    %1149 = vmatprep.subr.bf16.mxu0 %v899
    %1150 = vmatpush1.bf16.msra.mxu0 %v898
    %1151 = vmatprep.subr.bf16.mxu0 %v891
    %1152 = vmatpush1.bf16.msra.mxu0 %v890
    %1153 = vmatprep.subr.bf16.mxu0 %v883
    %1154 = vmatpush1.bf16.msra.mxu0 %v882
    %1155 = vmatprep.subr.bf16.mxu0 %v875
    %1156 = vmatpush1.bf16.msra.mxu0 %v874
    %1157 = vmatprep.subr.bf16.mxu0 %v867
    %1158 = vmatpush1.bf16.msra.mxu0 %v866
    %1159 = vmatprep.subr.bf16.mxu0 %v859
    %1160 = vmatpush1.bf16.msra.mxu0 %v858
    %1161 = vmatprep.subr.bf16.mxu0 %v851
    %1162 = vmatpush1.bf16.msra.mxu0 %v850
    %1163 = vmatprep.subr.bf16.mxu0 %v971
    %1164 = vmatpush2.bf16.msra.mxu0 %v970
    %1165 = vmatprep.subr.bf16.mxu0 %v963
    %1166 = vmatpush2.bf16.msra.mxu0 %v962
    %1167 = vmatprep.subr.bf16.mxu0 %v955
    %1168 = vmatpush2.bf16.msra.mxu0 %v954
    %1169 = vmatprep.subr.bf16.mxu0 %v947
    %1170 = vmatpush2.bf16.msra.mxu0 %v946
    %1171 = vmatprep.subr.bf16.mxu0 %v939
    %1172 = vmatpush2.bf16.msra.mxu0 %v938
    %1173 = vmatprep.subr.bf16.mxu0 %v931
    %1174 = vmatpush2.bf16.msra.mxu0 %v930
    %1175 = vmatprep.subr.bf16.mxu0 %v923
    %1176 = vmatpush2.bf16.msra.mxu0 %v922
    %1177 = vmatprep.subr.bf16.mxu0 %v915
    %1178 = vmatpush2.bf16.msra.mxu0 %v914
    %1179 = vmatprep.mubr.bf16.mxu0 %v293
    %1180 = vmatmul.mubr.bf16.gmra.mxu0 %v292
    %v1181 = vpop.f32.mrf.mxu0
    %v1182 = vadd.f32 %v435, %v1181
    %v1183 = vpop.f32.mrf.mxu0
    %v1184 = vadd.f32 %v439, %v1183
    %v1185 = vpop.f32.mrf.mxu0
    %v1186 = vadd.f32 %v435, %v1185
    %v1187 = vpop.f32.mrf.mxu0
    %v1188 = vadd.f32 %v439, %v1187
    %1189 = vdwg.mxu0
    %1190 = vmatprep.subr.bf16.mxu0 %v909
    %1191 = vmatpush1.bf16.msra.mxu0 %v908
    %1192 = vmatprep.subr.bf16.mxu0 %v901
    %1193 = vmatpush1.bf16.msra.mxu0 %v900
    %1194 = vmatprep.subr.bf16.mxu0 %v893
    %1195 = vmatpush1.bf16.msra.mxu0 %v892
    %1196 = vmatprep.subr.bf16.mxu0 %v885
    %1197 = vmatpush1.bf16.msra.mxu0 %v884
    %1198 = vmatprep.subr.bf16.mxu0 %v877
    %1199 = vmatpush1.bf16.msra.mxu0 %v876
    %1200 = vmatprep.subr.bf16.mxu0 %v869
    %1201 = vmatpush1.bf16.msra.mxu0 %v868
    %1202 = vmatprep.subr.bf16.mxu0 %v861
    %1203 = vmatpush1.bf16.msra.mxu0 %v860
    %1204 = vmatprep.subr.bf16.mxu0 %v853
    %1205 = vmatpush1.bf16.msra.mxu0 %v852
    %1206 = vmatprep.subr.bf16.mxu0 %v973
    %1207 = vmatpush2.bf16.msra.mxu0 %v972
    %1208 = vmatprep.subr.bf16.mxu0 %v965
    %1209 = vmatpush2.bf16.msra.mxu0 %v964
    %1210 = vmatprep.subr.bf16.mxu0 %v957
    %1211 = vmatpush2.bf16.msra.mxu0 %v956
    %1212 = vmatprep.subr.bf16.mxu0 %v949
    %1213 = vmatpush2.bf16.msra.mxu0 %v948
    %1214 = vmatprep.subr.bf16.mxu0 %v941
    %1215 = vmatpush2.bf16.msra.mxu0 %v940
    %1216 = vmatprep.subr.bf16.mxu0 %v933
    %1217 = vmatpush2.bf16.msra.mxu0 %v932
    %1218 = vmatprep.subr.bf16.mxu0 %v925
    %1219 = vmatpush2.bf16.msra.mxu0 %v924
    %1220 = vmatprep.subr.bf16.mxu0 %v917
    %1221 = vmatpush2.bf16.msra.mxu0 %v916
    %1222 = vmatprep.mubr.bf16.mxu0 %v293
    %1223 = vmatmul.mubr.bf16.gmra.mxu0 %v292
    %v1224 = vpop.f32.mrf.mxu0
    %v1225 = vadd.f32 %v443, %v1224
    %v1226 = vpop.f32.mrf.mxu0
    %v1227 = vadd.f32 %v447, %v1226
    %v1228 = vpop.f32.mrf.mxu0
    %v1229 = vadd.f32 %v443, %v1228
    %v1230 = vpop.f32.mrf.mxu0
    %v1231 = vadd.f32 %v447, %v1230
    %1232 = vdwg.mxu0
    %1233 = vmatprep.subr.bf16.mxu0 %v911
    %1234 = vmatpush1.bf16.msra.mxu0 %v910
    %1235 = vmatprep.subr.bf16.mxu0 %v903
    %1236 = vmatpush1.bf16.msra.mxu0 %v902
    %1237 = vmatprep.subr.bf16.mxu0 %v895
    %1238 = vmatpush1.bf16.msra.mxu0 %v894
    %1239 = vmatprep.subr.bf16.mxu0 %v887
    %1240 = vmatpush1.bf16.msra.mxu0 %v886
    %1241 = vmatprep.subr.bf16.mxu0 %v879
    %1242 = vmatpush1.bf16.msra.mxu0 %v878
    %1243 = vmatprep.subr.bf16.mxu0 %v871
    %1244 = vmatpush1.bf16.msra.mxu0 %v870
    %1245 = vmatprep.subr.bf16.mxu0 %v863
    %1246 = vmatpush1.bf16.msra.mxu0 %v862
    %1247 = vmatprep.subr.bf16.mxu0 %v855
    %1248 = vmatpush1.bf16.msra.mxu0 %v854
    %1249 = vmatprep.subr.bf16.mxu0 %v975
    %1250 = vmatpush2.bf16.msra.mxu0 %v974
    %1251 = vmatprep.subr.bf16.mxu0 %v967
    %1252 = vmatpush2.bf16.msra.mxu0 %v966
    %1253 = vmatprep.subr.bf16.mxu0 %v959
    %1254 = vmatpush2.bf16.msra.mxu0 %v958
    %1255 = vmatprep.subr.bf16.mxu0 %v951
    %1256 = vmatpush2.bf16.msra.mxu0 %v950
    %1257 = vmatprep.subr.bf16.mxu0 %v943
    %1258 = vmatpush2.bf16.msra.mxu0 %v942
    %1259 = vmatprep.subr.bf16.mxu0 %v935
    %1260 = vmatpush2.bf16.msra.mxu0 %v934
    %1261 = vmatprep.subr.bf16.mxu0 %v927
    %1262 = vmatpush2.bf16.msra.mxu0 %v926
    %1263 = vmatprep.subr.bf16.mxu0 %v919
    %1264 = vmatpush2.bf16.msra.mxu0 %v918
    %1265 = vmatprep.mubr.bf16.mxu0 %v293
    %1266 = vmatmul.mubr.bf16.gmra.mxu0 %v292
    %v1267 = vpop.f32.mrf.mxu0
    %v1268 = vadd.f32 %v451, %v1267
    %v1269 = vpop.f32.mrf.mxu0
    %v1270 = vadd.f32 %v455, %v1269
    %v1271 = vpop.f32.mrf.mxu0
    %v1272 = vadd.f32 %v451, %v1271
    %v1273 = vpop.f32.mrf.mxu0
    %v1274 = vadd.f32 %v455, %v1273
    %1275 = vdwg.mxu0
    %v1276 = vtanh.pop %v1139
    %v1277 = vtanh.pop %v1141
    %v1278 = vtanh.pop %v1182
    %v1279 = vtanh.pop %v1184
    %v1280 = vtanh.pop %v1225
    %v1281 = vtanh.pop %v1227
    %v1282 = vtanh.pop %v1268
    %v1283 = vtanh.pop %v1270
    %v1284 = vtanh.pop %v1143
    %v1285 = vtanh.pop %v1145
    %v1286 = vtanh.pop %v1186
    %v1287 = vtanh.pop %v1188
    %v1288 = vtanh.pop %v1229
    %v1289 = vtanh.pop %v1231
    %v1290 = vtanh.pop %v1272
    %v1291 = vtanh.pop %v1274
    %v1292 = vpack.c.bf16 %v1284, %v1276
    %v1293 = vpack.c.bf16 %v1285, %v1277
    %v1294 = vpack.c.bf16 %v1286, %v1278
    %v1295 = vpack.c.bf16 %v1287, %v1279
    %v1296 = vpack.c.bf16 %v1288, %v1280
    %v1297 = vpack.c.bf16 %v1289, %v1281
    %v1298 = vpack.c.bf16 %v1290, %v1282
    %v1299 = vpack.c.bf16 %v1291, %v1283
    %v1300 = vld [vmem:[#allocation4] sm:$0xff]
    %v1301 = vld [vmem:[#allocation4 + $0x8] sm:$0xff]
    %v1302 = vld [vmem:[#allocation4 + $0x10] sm:$0xff]
    %v1303 = vld [vmem:[#allocation4 + $0x18] sm:$0xff]
    %v1304 = vld [vmem:[#allocation4 + $0x20] sm:$0xff]
    %v1305 = vld [vmem:[#allocation4 + $0x28] sm:$0xff]
    %v1306 = vld [vmem:[#allocation4 + $0x30] sm:$0xff]
    %v1307 = vld [vmem:[#allocation4 + $0x38] sm:$0xff]
    %v1316 = vunpack.c.l.b16 %v1300
    %v1317 = vunpack.c.h.b16 %v1300
    %v1318 = vunpack.c.l.b16 %v1301
    %v1319 = vunpack.c.h.b16 %v1301
    %v1320 = vunpack.c.l.b16 %v1302
    %v1321 = vunpack.c.h.b16 %v1302
    %v1322 = vunpack.c.l.b16 %v1303
    %v1323 = vunpack.c.h.b16 %v1303
    %v1324 = vunpack.c.l.b16 %v1304
    %v1325 = vunpack.c.h.b16 %v1304
    %v1326 = vunpack.c.l.b16 %v1305
    %v1327 = vunpack.c.h.b16 %v1305
    %v1328 = vunpack.c.l.b16 %v1306
    %v1329 = vunpack.c.h.b16 %v1306
    %v1330 = vunpack.c.l.b16 %v1307
    %v1331 = vunpack.c.h.b16 %v1307
    %v1332 = vpack.c.b16 %v1324, %v1316
    %v1333 = vpack.c.b16 %v1325, %v1317
    %v1334 = vpack.c.b16 %v1326, %v1318
    %v1335 = vpack.c.b16 %v1327, %v1319
    %v1336 = vpack.c.b16 %v1328, %v1320
    %v1337 = vpack.c.b16 %v1329, %v1321
    %v1338 = vpack.c.b16 %v1330, %v1322
    %v1339 = vpack.c.b16 %v1331, %v1323
    %s1348 = smul.u32 4, 128
    %s1349 = smul.u32 %s1348, 2
    %s1350 = sshll.u32 %s1349, 4
    %1351 = dma.done [#allocation3], %s1350
    %v1352 = vld [vmem:[#allocation2] sm:$0xff]
    %v1353 = vld [vmem:[#allocation2 + $0x8] sm:$0xff]
    %v1354 = vld [vmem:[#allocation2 + $0x10] sm:$0xff]
    %v1355 = vld [vmem:[#allocation2 + $0x18] sm:$0xff]
    %v1356 = vld [vmem:[#allocation2 + $0x20] sm:$0xff]
    %v1357 = vld [vmem:[#allocation2 + $0x28] sm:$0xff]
    %v1358 = vld [vmem:[#allocation2 + $0x30] sm:$0xff]
    %v1359 = vld [vmem:[#allocation2 + $0x38] sm:$0xff]
    %v1360 = vld [vmem:[#allocation2 + $0x40] sm:$0xff]
    %v1361 = vld [vmem:[#allocation2 + $0x48] sm:$0xff]
    %v1362 = vld [vmem:[#allocation2 + $0x50] sm:$0xff]
    %v1363 = vld [vmem:[#allocation2 + $0x58] sm:$0xff]
    %v1364 = vld [vmem:[#allocation2 + $0x60] sm:$0xff]
    %v1365 = vld [vmem:[#allocation2 + $0x68] sm:$0xff]
    %v1366 = vld [vmem:[#allocation2 + $0x70] sm:$0xff]
    %v1367 = vld [vmem:[#allocation2 + $0x78] sm:$0xff]
    %v1368 = vld [vmem:[#allocation2 + $0x80] sm:$0xff]
    %v1369 = vld [vmem:[#allocation2 + $0x88] sm:$0xff]
    %v1370 = vld [vmem:[#allocation2 + $0x90] sm:$0xff]
    %v1371 = vld [vmem:[#allocation2 + $0x98] sm:$0xff]
    %v1372 = vld [vmem:[#allocation2 + $0xa0] sm:$0xff]
    %v1373 = vld [vmem:[#allocation2 + $0xa8] sm:$0xff]
    %v1374 = vld [vmem:[#allocation2 + $0xb0] sm:$0xff]
    %v1375 = vld [vmem:[#allocation2 + $0xb8] sm:$0xff]
    %v1376 = vld [vmem:[#allocation2 + $0xc0] sm:$0xff]
    %v1377 = vld [vmem:[#allocation2 + $0xc8] sm:$0xff]
    %v1378 = vld [vmem:[#allocation2 + $0xd0] sm:$0xff]
    %v1379 = vld [vmem:[#allocation2 + $0xd8] sm:$0xff]
    %v1380 = vld [vmem:[#allocation2 + $0xe0] sm:$0xff]
    %v1381 = vld [vmem:[#allocation2 + $0xe8] sm:$0xff]
    %v1382 = vld [vmem:[#allocation2 + $0xf0] sm:$0xff]
    %v1383 = vld [vmem:[#allocation2 + $0xf8] sm:$0xff]
    %v1384 = vld [vmem:[#allocation2 + $0x100] sm:$0xff]
    %v1385 = vld [vmem:[#allocation2 + $0x108] sm:$0xff]
    %v1386 = vld [vmem:[#allocation2 + $0x110] sm:$0xff]
    %v1387 = vld [vmem:[#allocation2 + $0x118] sm:$0xff]
    %v1388 = vld [vmem:[#allocation2 + $0x120] sm:$0xff]
    %v1389 = vld [vmem:[#allocation2 + $0x128] sm:$0xff]
    %v1390 = vld [vmem:[#allocation2 + $0x130] sm:$0xff]
    %v1391 = vld [vmem:[#allocation2 + $0x138] sm:$0xff]
    %v1392 = vld [vmem:[#allocation2 + $0x140] sm:$0xff]
    %v1393 = vld [vmem:[#allocation2 + $0x148] sm:$0xff]
    %v1394 = vld [vmem:[#allocation2 + $0x150] sm:$0xff]
    %v1395 = vld [vmem:[#allocation2 + $0x158] sm:$0xff]
    %v1396 = vld [vmem:[#allocation2 + $0x160] sm:$0xff]
    %v1397 = vld [vmem:[#allocation2 + $0x168] sm:$0xff]
    %v1398 = vld [vmem:[#allocation2 + $0x170] sm:$0xff]
    %v1399 = vld [vmem:[#allocation2 + $0x178] sm:$0xff]
    %v1400 = vld [vmem:[#allocation2 + $0x180] sm:$0xff]
    %v1401 = vld [vmem:[#allocation2 + $0x188] sm:$0xff]
    %v1402 = vld [vmem:[#allocation2 + $0x190] sm:$0xff]
    %v1403 = vld [vmem:[#allocation2 + $0x198] sm:$0xff]
    %v1404 = vld [vmem:[#allocation2 + $0x1a0] sm:$0xff]
    %v1405 = vld [vmem:[#allocation2 + $0x1a8] sm:$0xff]
    %v1406 = vld [vmem:[#allocation2 + $0x1b0] sm:$0xff]
    %v1407 = vld [vmem:[#allocation2 + $0x1b8] sm:$0xff]
    %v1408 = vld [vmem:[#allocation2 + $0x1c0] sm:$0xff]
    %v1409 = vld [vmem:[#allocation2 + $0x1c8] sm:$0xff]
    %v1410 = vld [vmem:[#allocation2 + $0x1d0] sm:$0xff]
    %v1411 = vld [vmem:[#allocation2 + $0x1d8] sm:$0xff]
    %v1412 = vld [vmem:[#allocation2 + $0x1e0] sm:$0xff]
    %v1413 = vld [vmem:[#allocation2 + $0x1e8] sm:$0xff]
    %v1414 = vld [vmem:[#allocation2 + $0x1f0] sm:$0xff]
    %v1415 = vld [vmem:[#allocation2 + $0x1f8] sm:$0xff]
    %v1416 = vld [vmem:[#allocation2 + $0x200] sm:$0xff]
    %v1417 = vld [vmem:[#allocation2 + $0x208] sm:$0xff]
    %v1418 = vld [vmem:[#allocation2 + $0x210] sm:$0xff]
    %v1419 = vld [vmem:[#allocation2 + $0x218] sm:$0xff]
    %v1420 = vld [vmem:[#allocation2 + $0x220] sm:$0xff]
    %v1421 = vld [vmem:[#allocation2 + $0x228] sm:$0xff]
    %v1422 = vld [vmem:[#allocation2 + $0x230] sm:$0xff]
    %v1423 = vld [vmem:[#allocation2 + $0x238] sm:$0xff]
    %v1424 = vld [vmem:[#allocation2 + $0x240] sm:$0xff]
    %v1425 = vld [vmem:[#allocation2 + $0x248] sm:$0xff]
    %v1426 = vld [vmem:[#allocation2 + $0x250] sm:$0xff]
    %v1427 = vld [vmem:[#allocation2 + $0x258] sm:$0xff]
    %v1428 = vld [vmem:[#allocation2 + $0x260] sm:$0xff]
    %v1429 = vld [vmem:[#allocation2 + $0x268] sm:$0xff]
    %v1430 = vld [vmem:[#allocation2 + $0x270] sm:$0xff]
    %v1431 = vld [vmem:[#allocation2 + $0x278] sm:$0xff]
    %v1432 = vld [vmem:[#allocation2 + $0x280] sm:$0xff]
    %v1433 = vld [vmem:[#allocation2 + $0x288] sm:$0xff]
    %v1434 = vld [vmem:[#allocation2 + $0x290] sm:$0xff]
    %v1435 = vld [vmem:[#allocation2 + $0x298] sm:$0xff]
    %v1436 = vld [vmem:[#allocation2 + $0x2a0] sm:$0xff]
    %v1437 = vld [vmem:[#allocation2 + $0x2a8] sm:$0xff]
    %v1438 = vld [vmem:[#allocation2 + $0x2b0] sm:$0xff]
    %v1439 = vld [vmem:[#allocation2 + $0x2b8] sm:$0xff]
    %v1440 = vld [vmem:[#allocation2 + $0x2c0] sm:$0xff]
    %v1441 = vld [vmem:[#allocation2 + $0x2c8] sm:$0xff]
    %v1442 = vld [vmem:[#allocation2 + $0x2d0] sm:$0xff]
    %v1443 = vld [vmem:[#allocation2 + $0x2d8] sm:$0xff]
    %v1444 = vld [vmem:[#allocation2 + $0x2e0] sm:$0xff]
    %v1445 = vld [vmem:[#allocation2 + $0x2e8] sm:$0xff]
    %v1446 = vld [vmem:[#allocation2 + $0x2f0] sm:$0xff]
    %v1447 = vld [vmem:[#allocation2 + $0x2f8] sm:$0xff]
    %v1448 = vld [vmem:[#allocation2 + $0x300] sm:$0xff]
    %v1449 = vld [vmem:[#allocation2 + $0x308] sm:$0xff]
    %v1450 = vld [vmem:[#allocation2 + $0x310] sm:$0xff]
    %v1451 = vld [vmem:[#allocation2 + $0x318] sm:$0xff]
    %v1452 = vld [vmem:[#allocation2 + $0x320] sm:$0xff]
    %v1453 = vld [vmem:[#allocation2 + $0x328] sm:$0xff]
    %v1454 = vld [vmem:[#allocation2 + $0x330] sm:$0xff]
    %v1455 = vld [vmem:[#allocation2 + $0x338] sm:$0xff]
    %v1456 = vld [vmem:[#allocation2 + $0x340] sm:$0xff]
    %v1457 = vld [vmem:[#allocation2 + $0x348] sm:$0xff]
    %v1458 = vld [vmem:[#allocation2 + $0x350] sm:$0xff]
    %v1459 = vld [vmem:[#allocation2 + $0x358] sm:$0xff]
    %v1460 = vld [vmem:[#allocation2 + $0x360] sm:$0xff]
    %v1461 = vld [vmem:[#allocation2 + $0x368] sm:$0xff]
    %v1462 = vld [vmem:[#allocation2 + $0x370] sm:$0xff]
    %v1463 = vld [vmem:[#allocation2 + $0x378] sm:$0xff]
    %v1464 = vld [vmem:[#allocation2 + $0x380] sm:$0xff]
    %v1465 = vld [vmem:[#allocation2 + $0x388] sm:$0xff]
    %v1466 = vld [vmem:[#allocation2 + $0x390] sm:$0xff]
    %v1467 = vld [vmem:[#allocation2 + $0x398] sm:$0xff]
    %v1468 = vld [vmem:[#allocation2 + $0x3a0] sm:$0xff]
    %v1469 = vld [vmem:[#allocation2 + $0x3a8] sm:$0xff]
    %v1470 = vld [vmem:[#allocation2 + $0x3b0] sm:$0xff]
    %v1471 = vld [vmem:[#allocation2 + $0x3b8] sm:$0xff]
    %v1472 = vld [vmem:[#allocation2 + $0x3c0] sm:$0xff]
    %v1473 = vld [vmem:[#allocation2 + $0x3c8] sm:$0xff]
    %v1474 = vld [vmem:[#allocation2 + $0x3d0] sm:$0xff]
    %v1475 = vld [vmem:[#allocation2 + $0x3d8] sm:$0xff]
    %v1476 = vld [vmem:[#allocation2 + $0x3e0] sm:$0xff]
    %v1477 = vld [vmem:[#allocation2 + $0x3e8] sm:$0xff]
    %v1478 = vld [vmem:[#allocation2 + $0x3f0] sm:$0xff]
    %v1479 = vld [vmem:[#allocation2 + $0x3f8] sm:$0xff]
    %v1480 = vld [vmem:[%s7] sm:$0x3]
    %v1482 = vlaneseq
    %v1483 = vshrl.u32 %v1482, 7
    %v1484 = vsub.s32 0, %v1483
    %v1485 = vrot.slane %v1480, %v1484
    %v1486 = vlaneseq
    %v1487 = vshrl.u32 %v1486, 7
    %v1488 = vsub.s32 1, %v1487
    %v1489 = vrot.slane %v1480, %v1488
    %v1620 = vunpack.c.l.b16 %v1352
    %v1621 = vunpack.c.h.b16 %v1352
    %v1622 = vunpack.c.l.b16 %v1353
    %v1623 = vunpack.c.h.b16 %v1353
    %v1624 = vunpack.c.l.b16 %v1354
    %v1625 = vunpack.c.h.b16 %v1354
    %v1626 = vunpack.c.l.b16 %v1355
    %v1627 = vunpack.c.h.b16 %v1355
    %v1628 = vunpack.c.l.b16 %v1356
    %v1629 = vunpack.c.h.b16 %v1356
    %v1630 = vunpack.c.l.b16 %v1357
    %v1631 = vunpack.c.h.b16 %v1357
    %v1632 = vunpack.c.l.b16 %v1358
    %v1633 = vunpack.c.h.b16 %v1358
    %v1634 = vunpack.c.l.b16 %v1359
    %v1635 = vunpack.c.h.b16 %v1359
    %v1636 = vunpack.c.l.b16 %v1360
    %v1637 = vunpack.c.h.b16 %v1360
    %v1638 = vunpack.c.l.b16 %v1361
    %v1639 = vunpack.c.h.b16 %v1361
    %v1640 = vunpack.c.l.b16 %v1362
    %v1641 = vunpack.c.h.b16 %v1362
    %v1642 = vunpack.c.l.b16 %v1363
    %v1643 = vunpack.c.h.b16 %v1363
    %v1644 = vunpack.c.l.b16 %v1364
    %v1645 = vunpack.c.h.b16 %v1364
    %v1646 = vunpack.c.l.b16 %v1365
    %v1647 = vunpack.c.h.b16 %v1365
    %v1648 = vunpack.c.l.b16 %v1366
    %v1649 = vunpack.c.h.b16 %v1366
    %v1650 = vunpack.c.l.b16 %v1367
    %v1651 = vunpack.c.h.b16 %v1367
    %v1652 = vunpack.c.l.b16 %v1368
    %v1653 = vunpack.c.h.b16 %v1368
    %v1654 = vunpack.c.l.b16 %v1369
    %v1655 = vunpack.c.h.b16 %v1369
    %v1656 = vunpack.c.l.b16 %v1370
    %v1657 = vunpack.c.h.b16 %v1370
    %v1658 = vunpack.c.l.b16 %v1371
    %v1659 = vunpack.c.h.b16 %v1371
    %v1660 = vunpack.c.l.b16 %v1372
    %v1661 = vunpack.c.h.b16 %v1372
    %v1662 = vunpack.c.l.b16 %v1373
    %v1663 = vunpack.c.h.b16 %v1373
    %v1664 = vunpack.c.l.b16 %v1374
    %v1665 = vunpack.c.h.b16 %v1374
    %v1666 = vunpack.c.l.b16 %v1375
    %v1667 = vunpack.c.h.b16 %v1375
    %v1668 = vunpack.c.l.b16 %v1376
    %v1669 = vunpack.c.h.b16 %v1376
    %v1670 = vunpack.c.l.b16 %v1377
    %v1671 = vunpack.c.h.b16 %v1377
    %v1672 = vunpack.c.l.b16 %v1378
    %v1673 = vunpack.c.h.b16 %v1378
    %v1674 = vunpack.c.l.b16 %v1379
    %v1675 = vunpack.c.h.b16 %v1379
    %v1676 = vunpack.c.l.b16 %v1380
    %v1677 = vunpack.c.h.b16 %v1380
    %v1678 = vunpack.c.l.b16 %v1381
    %v1679 = vunpack.c.h.b16 %v1381
    %v1680 = vunpack.c.l.b16 %v1382
    %v1681 = vunpack.c.h.b16 %v1382
    %v1682 = vunpack.c.l.b16 %v1383
    %v1683 = vunpack.c.h.b16 %v1383
    %v1684 = vunpack.c.l.b16 %v1384
    %v1685 = vunpack.c.h.b16 %v1384
    %v1686 = vunpack.c.l.b16 %v1385
    %v1687 = vunpack.c.h.b16 %v1385
    %v1688 = vunpack.c.l.b16 %v1386
    %v1689 = vunpack.c.h.b16 %v1386
    %v1690 = vunpack.c.l.b16 %v1387
    %v1691 = vunpack.c.h.b16 %v1387
    %v1692 = vunpack.c.l.b16 %v1388
    %v1693 = vunpack.c.h.b16 %v1388
    %v1694 = vunpack.c.l.b16 %v1389
    %v1695 = vunpack.c.h.b16 %v1389
    %v1696 = vunpack.c.l.b16 %v1390
    %v1697 = vunpack.c.h.b16 %v1390
    %v1698 = vunpack.c.l.b16 %v1391
    %v1699 = vunpack.c.h.b16 %v1391
    %v1700 = vunpack.c.l.b16 %v1392
    %v1701 = vunpack.c.h.b16 %v1392
    %v1702 = vunpack.c.l.b16 %v1393
    %v1703 = vunpack.c.h.b16 %v1393
    %v1704 = vunpack.c.l.b16 %v1394
    %v1705 = vunpack.c.h.b16 %v1394
    %v1706 = vunpack.c.l.b16 %v1395
    %v1707 = vunpack.c.h.b16 %v1395
    %v1708 = vunpack.c.l.b16 %v1396
    %v1709 = vunpack.c.h.b16 %v1396
    %v1710 = vunpack.c.l.b16 %v1397
    %v1711 = vunpack.c.h.b16 %v1397
    %v1712 = vunpack.c.l.b16 %v1398
    %v1713 = vunpack.c.h.b16 %v1398
    %v1714 = vunpack.c.l.b16 %v1399
    %v1715 = vunpack.c.h.b16 %v1399
    %v1716 = vunpack.c.l.b16 %v1400
    %v1717 = vunpack.c.h.b16 %v1400
    %v1718 = vunpack.c.l.b16 %v1401
    %v1719 = vunpack.c.h.b16 %v1401
    %v1720 = vunpack.c.l.b16 %v1402
    %v1721 = vunpack.c.h.b16 %v1402
    %v1722 = vunpack.c.l.b16 %v1403
    %v1723 = vunpack.c.h.b16 %v1403
    %v1724 = vunpack.c.l.b16 %v1404
    %v1725 = vunpack.c.h.b16 %v1404
    %v1726 = vunpack.c.l.b16 %v1405
    %v1727 = vunpack.c.h.b16 %v1405
    %v1728 = vunpack.c.l.b16 %v1406
    %v1729 = vunpack.c.h.b16 %v1406
    %v1730 = vunpack.c.l.b16 %v1407
    %v1731 = vunpack.c.h.b16 %v1407
    %v1732 = vunpack.c.l.b16 %v1408
    %v1733 = vunpack.c.h.b16 %v1408
    %v1734 = vunpack.c.l.b16 %v1409
    %v1735 = vunpack.c.h.b16 %v1409
    %v1736 = vunpack.c.l.b16 %v1410
    %v1737 = vunpack.c.h.b16 %v1410
    %v1738 = vunpack.c.l.b16 %v1411
    %v1739 = vunpack.c.h.b16 %v1411
    %v1740 = vunpack.c.l.b16 %v1412
    %v1741 = vunpack.c.h.b16 %v1412
    %v1742 = vunpack.c.l.b16 %v1413
    %v1743 = vunpack.c.h.b16 %v1413
    %v1744 = vunpack.c.l.b16 %v1414
    %v1745 = vunpack.c.h.b16 %v1414
    %v1746 = vunpack.c.l.b16 %v1415
    %v1747 = vunpack.c.h.b16 %v1415
    %v1748 = vunpack.c.l.b16 %v1416
    %v1749 = vunpack.c.h.b16 %v1416
    %v1750 = vunpack.c.l.b16 %v1417
    %v1751 = vunpack.c.h.b16 %v1417
    %v1752 = vunpack.c.l.b16 %v1418
    %v1753 = vunpack.c.h.b16 %v1418
    %v1754 = vunpack.c.l.b16 %v1419
    %v1755 = vunpack.c.h.b16 %v1419
    %v1756 = vunpack.c.l.b16 %v1420
    %v1757 = vunpack.c.h.b16 %v1420
    %v1758 = vunpack.c.l.b16 %v1421
    %v1759 = vunpack.c.h.b16 %v1421
    %v1760 = vunpack.c.l.b16 %v1422
    %v1761 = vunpack.c.h.b16 %v1422
    %v1762 = vunpack.c.l.b16 %v1423
    %v1763 = vunpack.c.h.b16 %v1423
    %v1764 = vunpack.c.l.b16 %v1424
    %v1765 = vunpack.c.h.b16 %v1424
    %v1766 = vunpack.c.l.b16 %v1425
    %v1767 = vunpack.c.h.b16 %v1425
    %v1768 = vunpack.c.l.b16 %v1426
    %v1769 = vunpack.c.h.b16 %v1426
    %v1770 = vunpack.c.l.b16 %v1427
    %v1771 = vunpack.c.h.b16 %v1427
    %v1772 = vunpack.c.l.b16 %v1428
    %v1773 = vunpack.c.h.b16 %v1428
    %v1774 = vunpack.c.l.b16 %v1429
    %v1775 = vunpack.c.h.b16 %v1429
    %v1776 = vunpack.c.l.b16 %v1430
    %v1777 = vunpack.c.h.b16 %v1430
    %v1778 = vunpack.c.l.b16 %v1431
    %v1779 = vunpack.c.h.b16 %v1431
    %v1780 = vunpack.c.l.b16 %v1432
    %v1781 = vunpack.c.h.b16 %v1432
    %v1782 = vunpack.c.l.b16 %v1433
    %v1783 = vunpack.c.h.b16 %v1433
    %v1784 = vunpack.c.l.b16 %v1434
    %v1785 = vunpack.c.h.b16 %v1434
    %v1786 = vunpack.c.l.b16 %v1435
    %v1787 = vunpack.c.h.b16 %v1435
    %v1788 = vunpack.c.l.b16 %v1436
    %v1789 = vunpack.c.h.b16 %v1436
    %v1790 = vunpack.c.l.b16 %v1437
    %v1791 = vunpack.c.h.b16 %v1437
    %v1792 = vunpack.c.l.b16 %v1438
    %v1793 = vunpack.c.h.b16 %v1438
    %v1794 = vunpack.c.l.b16 %v1439
    %v1795 = vunpack.c.h.b16 %v1439
    %v1796 = vunpack.c.l.b16 %v1440
    %v1797 = vunpack.c.h.b16 %v1440
    %v1798 = vunpack.c.l.b16 %v1441
    %v1799 = vunpack.c.h.b16 %v1441
    %v1800 = vunpack.c.l.b16 %v1442
    %v1801 = vunpack.c.h.b16 %v1442
    %v1802 = vunpack.c.l.b16 %v1443
    %v1803 = vunpack.c.h.b16 %v1443
    %v1804 = vunpack.c.l.b16 %v1444
    %v1805 = vunpack.c.h.b16 %v1444
    %v1806 = vunpack.c.l.b16 %v1445
    %v1807 = vunpack.c.h.b16 %v1445
    %v1808 = vunpack.c.l.b16 %v1446
    %v1809 = vunpack.c.h.b16 %v1446
    %v1810 = vunpack.c.l.b16 %v1447
    %v1811 = vunpack.c.h.b16 %v1447
    %v1812 = vunpack.c.l.b16 %v1448
    %v1813 = vunpack.c.h.b16 %v1448
    %v1814 = vunpack.c.l.b16 %v1449
    %v1815 = vunpack.c.h.b16 %v1449
    %v1816 = vunpack.c.l.b16 %v1450
    %v1817 = vunpack.c.h.b16 %v1450
    %v1818 = vunpack.c.l.b16 %v1451
    %v1819 = vunpack.c.h.b16 %v1451
    %v1820 = vunpack.c.l.b16 %v1452
    %v1821 = vunpack.c.h.b16 %v1452
    %v1822 = vunpack.c.l.b16 %v1453
    %v1823 = vunpack.c.h.b16 %v1453
    %v1824 = vunpack.c.l.b16 %v1454
    %v1825 = vunpack.c.h.b16 %v1454
    %v1826 = vunpack.c.l.b16 %v1455
    %v1827 = vunpack.c.h.b16 %v1455
    %v1828 = vunpack.c.l.b16 %v1456
    %v1829 = vunpack.c.h.b16 %v1456
    %v1830 = vunpack.c.l.b16 %v1457
    %v1831 = vunpack.c.h.b16 %v1457
    %v1832 = vunpack.c.l.b16 %v1458
    %v1833 = vunpack.c.h.b16 %v1458
    %v1834 = vunpack.c.l.b16 %v1459
    %v1835 = vunpack.c.h.b16 %v1459
    %v1836 = vunpack.c.l.b16 %v1460
    %v1837 = vunpack.c.h.b16 %v1460
    %v1838 = vunpack.c.l.b16 %v1461
    %v1839 = vunpack.c.h.b16 %v1461
    %v1840 = vunpack.c.l.b16 %v1462
    %v1841 = vunpack.c.h.b16 %v1462
    %v1842 = vunpack.c.l.b16 %v1463
    %v1843 = vunpack.c.h.b16 %v1463
    %v1844 = vunpack.c.l.b16 %v1464
    %v1845 = vunpack.c.h.b16 %v1464
    %v1846 = vunpack.c.l.b16 %v1465
    %v1847 = vunpack.c.h.b16 %v1465
    %v1848 = vunpack.c.l.b16 %v1466
    %v1849 = vunpack.c.h.b16 %v1466
    %v1850 = vunpack.c.l.b16 %v1467
    %v1851 = vunpack.c.h.b16 %v1467
    %v1852 = vunpack.c.l.b16 %v1468
    %v1853 = vunpack.c.h.b16 %v1468
    %v1854 = vunpack.c.l.b16 %v1469
    %v1855 = vunpack.c.h.b16 %v1469
    %v1856 = vunpack.c.l.b16 %v1470
    %v1857 = vunpack.c.h.b16 %v1470
    %v1858 = vunpack.c.l.b16 %v1471
    %v1859 = vunpack.c.h.b16 %v1471
    %v1860 = vunpack.c.l.b16 %v1472
    %v1861 = vunpack.c.h.b16 %v1472
    %v1862 = vunpack.c.l.b16 %v1473
    %v1863 = vunpack.c.h.b16 %v1473
    %v1864 = vunpack.c.l.b16 %v1474
    %v1865 = vunpack.c.h.b16 %v1474
    %v1866 = vunpack.c.l.b16 %v1475
    %v1867 = vunpack.c.h.b16 %v1475
    %v1868 = vunpack.c.l.b16 %v1476
    %v1869 = vunpack.c.h.b16 %v1476
    %v1870 = vunpack.c.l.b16 %v1477
    %v1871 = vunpack.c.h.b16 %v1477
    %v1872 = vunpack.c.l.b16 %v1478
    %v1873 = vunpack.c.h.b16 %v1478
    %v1874 = vunpack.c.l.b16 %v1479
    %v1875 = vunpack.c.h.b16 %v1479
    %v1876 = vpack.c.b16 %v1622, %v1620
    %v1877 = vpack.c.b16 %v1623, %v1621
    %v1878 = vpack.c.b16 %v1626, %v1624
    %v1879 = vpack.c.b16 %v1627, %v1625
    %v1880 = vpack.c.b16 %v1630, %v1628
    %v1881 = vpack.c.b16 %v1631, %v1629
    %v1882 = vpack.c.b16 %v1634, %v1632
    %v1883 = vpack.c.b16 %v1635, %v1633
    %v1884 = vpack.c.b16 %v1638, %v1636
    %v1885 = vpack.c.b16 %v1639, %v1637
    %v1886 = vpack.c.b16 %v1642, %v1640
    %v1887 = vpack.c.b16 %v1643, %v1641
    %v1888 = vpack.c.b16 %v1646, %v1644
    %v1889 = vpack.c.b16 %v1647, %v1645
    %v1890 = vpack.c.b16 %v1650, %v1648
    %v1891 = vpack.c.b16 %v1651, %v1649
    %v1892 = vpack.c.b16 %v1654, %v1652
    %v1893 = vpack.c.b16 %v1655, %v1653
    %v1894 = vpack.c.b16 %v1658, %v1656
    %v1895 = vpack.c.b16 %v1659, %v1657
    %v1896 = vpack.c.b16 %v1662, %v1660
    %v1897 = vpack.c.b16 %v1663, %v1661
    %v1898 = vpack.c.b16 %v1666, %v1664
    %v1899 = vpack.c.b16 %v1667, %v1665
    %v1900 = vpack.c.b16 %v1670, %v1668
    %v1901 = vpack.c.b16 %v1671, %v1669
    %v1902 = vpack.c.b16 %v1674, %v1672
    %v1903 = vpack.c.b16 %v1675, %v1673
    %v1904 = vpack.c.b16 %v1678, %v1676
    %v1905 = vpack.c.b16 %v1679, %v1677
    %v1906 = vpack.c.b16 %v1682, %v1680
    %v1907 = vpack.c.b16 %v1683, %v1681
    %v1908 = vpack.c.b16 %v1686, %v1684
    %v1909 = vpack.c.b16 %v1687, %v1685
    %v1910 = vpack.c.b16 %v1690, %v1688
    %v1911 = vpack.c.b16 %v1691, %v1689
    %v1912 = vpack.c.b16 %v1694, %v1692
    %v1913 = vpack.c.b16 %v1695, %v1693
    %v1914 = vpack.c.b16 %v1698, %v1696
    %v1915 = vpack.c.b16 %v1699, %v1697
    %v1916 = vpack.c.b16 %v1702, %v1700
    %v1917 = vpack.c.b16 %v1703, %v1701
    %v1918 = vpack.c.b16 %v1706, %v1704
    %v1919 = vpack.c.b16 %v1707, %v1705
    %v1920 = vpack.c.b16 %v1710, %v1708
    %v1921 = vpack.c.b16 %v1711, %v1709
    %v1922 = vpack.c.b16 %v1714, %v1712
    %v1923 = vpack.c.b16 %v1715, %v1713
    %v1924 = vpack.c.b16 %v1718, %v1716
    %v1925 = vpack.c.b16 %v1719, %v1717
    %v1926 = vpack.c.b16 %v1722, %v1720
    %v1927 = vpack.c.b16 %v1723, %v1721
    %v1928 = vpack.c.b16 %v1726, %v1724
    %v1929 = vpack.c.b16 %v1727, %v1725
    %v1930 = vpack.c.b16 %v1730, %v1728
    %v1931 = vpack.c.b16 %v1731, %v1729
    %v1932 = vpack.c.b16 %v1734, %v1732
    %v1933 = vpack.c.b16 %v1735, %v1733
    %v1934 = vpack.c.b16 %v1738, %v1736
    %v1935 = vpack.c.b16 %v1739, %v1737
    %v1936 = vpack.c.b16 %v1742, %v1740
    %v1937 = vpack.c.b16 %v1743, %v1741
    %v1938 = vpack.c.b16 %v1746, %v1744
    %v1939 = vpack.c.b16 %v1747, %v1745
    %v1940 = vpack.c.b16 %v1750, %v1748
    %v1941 = vpack.c.b16 %v1751, %v1749
    %v1942 = vpack.c.b16 %v1754, %v1752
    %v1943 = vpack.c.b16 %v1755, %v1753
    %v1944 = vpack.c.b16 %v1758, %v1756
    %v1945 = vpack.c.b16 %v1759, %v1757
    %v1946 = vpack.c.b16 %v1762, %v1760
    %v1947 = vpack.c.b16 %v1763, %v1761
    %v1948 = vpack.c.b16 %v1766, %v1764
    %v1949 = vpack.c.b16 %v1767, %v1765
    %v1950 = vpack.c.b16 %v1770, %v1768
    %v1951 = vpack.c.b16 %v1771, %v1769
    %v1952 = vpack.c.b16 %v1774, %v1772
    %v1953 = vpack.c.b16 %v1775, %v1773
    %v1954 = vpack.c.b16 %v1778, %v1776
    %v1955 = vpack.c.b16 %v1779, %v1777
    %v1956 = vpack.c.b16 %v1782, %v1780
    %v1957 = vpack.c.b16 %v1783, %v1781
    %v1958 = vpack.c.b16 %v1786, %v1784
    %v1959 = vpack.c.b16 %v1787, %v1785
    %v1960 = vpack.c.b16 %v1790, %v1788
    %v1961 = vpack.c.b16 %v1791, %v1789
    %v1962 = vpack.c.b16 %v1794, %v1792
    %v1963 = vpack.c.b16 %v1795, %v1793
    %v1964 = vpack.c.b16 %v1798, %v1796
    %v1965 = vpack.c.b16 %v1799, %v1797
    %v1966 = vpack.c.b16 %v1802, %v1800
    %v1967 = vpack.c.b16 %v1803, %v1801
    %v1968 = vpack.c.b16 %v1806, %v1804
    %v1969 = vpack.c.b16 %v1807, %v1805
    %v1970 = vpack.c.b16 %v1810, %v1808
    %v1971 = vpack.c.b16 %v1811, %v1809
    %v1972 = vpack.c.b16 %v1814, %v1812
    %v1973 = vpack.c.b16 %v1815, %v1813
    %v1974 = vpack.c.b16 %v1818, %v1816
    %v1975 = vpack.c.b16 %v1819, %v1817
    %v1976 = vpack.c.b16 %v1822, %v1820
    %v1977 = vpack.c.b16 %v1823, %v1821
    %v1978 = vpack.c.b16 %v1826, %v1824
    %v1979 = vpack.c.b16 %v1827, %v1825
    %v1980 = vpack.c.b16 %v1830, %v1828
    %v1981 = vpack.c.b16 %v1831, %v1829
    %v1982 = vpack.c.b16 %v1834, %v1832
    %v1983 = vpack.c.b16 %v1835, %v1833
    %v1984 = vpack.c.b16 %v1838, %v1836
    %v1985 = vpack.c.b16 %v1839, %v1837
    %v1986 = vpack.c.b16 %v1842, %v1840
    %v1987 = vpack.c.b16 %v1843, %v1841
    %v1988 = vpack.c.b16 %v1846, %v1844
    %v1989 = vpack.c.b16 %v1847, %v1845
    %v1990 = vpack.c.b16 %v1850, %v1848
    %v1991 = vpack.c.b16 %v1851, %v1849
    %v1992 = vpack.c.b16 %v1854, %v1852
    %v1993 = vpack.c.b16 %v1855, %v1853
    %v1994 = vpack.c.b16 %v1858, %v1856
    %v1995 = vpack.c.b16 %v1859, %v1857
    %v1996 = vpack.c.b16 %v1862, %v1860
    %v1997 = vpack.c.b16 %v1863, %v1861
    %v1998 = vpack.c.b16 %v1866, %v1864
    %v1999 = vpack.c.b16 %v1867, %v1865
    %v2000 = vpack.c.b16 %v1870, %v1868
    %v2001 = vpack.c.b16 %v1871, %v1869
    %v2002 = vpack.c.b16 %v1874, %v1872
    %v2003 = vpack.c.b16 %v1875, %v1873
    %2132 = vmatprep.subr.bf16.mxu0 %v1891
    %2133 = vmatpush1.bf16.msra.mxu0 %v1890
    %2134 = vmatprep.subr.bf16.mxu0 %v1889
    %2135 = vmatpush1.bf16.msra.mxu0 %v1888
    %2136 = vmatprep.subr.bf16.mxu0 %v1887
    %2137 = vmatpush1.bf16.msra.mxu0 %v1886
    %2138 = vmatprep.subr.bf16.mxu0 %v1885
    %2139 = vmatpush1.bf16.msra.mxu0 %v1884
    %2140 = vmatprep.subr.bf16.mxu0 %v1883
    %2141 = vmatpush1.bf16.msra.mxu0 %v1882
    %2142 = vmatprep.subr.bf16.mxu0 %v1881
    %2143 = vmatpush1.bf16.msra.mxu0 %v1880
    %2144 = vmatprep.subr.bf16.mxu0 %v1879
    %2145 = vmatpush1.bf16.msra.mxu0 %v1878
    %2146 = vmatprep.subr.bf16.mxu0 %v1877
    %2147 = vmatpush1.bf16.msra.mxu0 %v1876
    %2148 = vmatprep.subr.bf16.mxu0 %v1907
    %2149 = vmatpush2.bf16.msra.mxu0 %v1906
    %2150 = vmatprep.subr.bf16.mxu0 %v1905
    %2151 = vmatpush2.bf16.msra.mxu0 %v1904
    %2152 = vmatprep.subr.bf16.mxu0 %v1903
    %2153 = vmatpush2.bf16.msra.mxu0 %v1902
    %2154 = vmatprep.subr.bf16.mxu0 %v1901
    %2155 = vmatpush2.bf16.msra.mxu0 %v1900
    %2156 = vmatprep.subr.bf16.mxu0 %v1899
    %2157 = vmatpush2.bf16.msra.mxu0 %v1898
    %2158 = vmatprep.subr.bf16.mxu0 %v1897
    %2159 = vmatpush2.bf16.msra.mxu0 %v1896
    %2160 = vmatprep.subr.bf16.mxu0 %v1895
    %2161 = vmatpush2.bf16.msra.mxu0 %v1894
    %2162 = vmatprep.subr.bf16.mxu0 %v1893
    %2163 = vmatpush2.bf16.msra.mxu0 %v1892
    %2164 = vmatprep.mubr.bf16.mxu0 %v1333
    %2165 = vmatmul.mubr.bf16.gmra.mxu0 %v1332
    %v2166 = vpop.f32.mrf.mxu0
    %v2167 = vadd.f32 %v1485, %v2166
    %v2168 = vpop.f32.mrf.mxu0
    %v2169 = vadd.f32 %v1489, %v2168
    %v2170 = vpop.f32.mrf.mxu0
    %v2171 = vadd.f32 %v1485, %v2170
    %v2172 = vpop.f32.mrf.mxu0
    %v2173 = vadd.f32 %v1489, %v2172
    %2174 = vmatprep.mubr.bf16.mxu0 %v1293
    %2175 = vmatmul.mubr.bf16.gmra.mxu0 %v1292
    %v2176 = vpop.f32.mrf.mxu0
    %v2177 = vadd.f32 %v1485, %v2176
    %v2178 = vpop.f32.mrf.mxu0
    %v2179 = vadd.f32 %v1489, %v2178
    %v2180 = vpop.f32.mrf.mxu0
    %v2181 = vadd.f32 %v1485, %v2180
    %v2182 = vpop.f32.mrf.mxu0
    %v2183 = vadd.f32 %v1489, %v2182
    %2184 = vdwg.mxu0
    %2185 = vmatprep.subr.bf16.mxu0 %v1923
    %2186 = vmatpush1.bf16.msra.mxu0 %v1922
    %2187 = vmatprep.subr.bf16.mxu0 %v1921
    %2188 = vmatpush1.bf16.msra.mxu0 %v1920
    %2189 = vmatprep.subr.bf16.mxu0 %v1919
    %2190 = vmatpush1.bf16.msra.mxu0 %v1918
    %2191 = vmatprep.subr.bf16.mxu0 %v1917
    %2192 = vmatpush1.bf16.msra.mxu0 %v1916
    %2193 = vmatprep.subr.bf16.mxu0 %v1915
    %2194 = vmatpush1.bf16.msra.mxu0 %v1914
    %2195 = vmatprep.subr.bf16.mxu0 %v1913
    %2196 = vmatpush1.bf16.msra.mxu0 %v1912
    %2197 = vmatprep.subr.bf16.mxu0 %v1911
    %2198 = vmatpush1.bf16.msra.mxu0 %v1910
    %2199 = vmatprep.subr.bf16.mxu0 %v1909
    %2200 = vmatpush1.bf16.msra.mxu0 %v1908
    %2201 = vmatprep.subr.bf16.mxu0 %v1939
    %2202 = vmatpush2.bf16.msra.mxu0 %v1938
    %2203 = vmatprep.subr.bf16.mxu0 %v1937
    %2204 = vmatpush2.bf16.msra.mxu0 %v1936
    %2205 = vmatprep.subr.bf16.mxu0 %v1935
    %2206 = vmatpush2.bf16.msra.mxu0 %v1934
    %2207 = vmatprep.subr.bf16.mxu0 %v1933
    %2208 = vmatpush2.bf16.msra.mxu0 %v1932
    %2209 = vmatprep.subr.bf16.mxu0 %v1931
    %2210 = vmatpush2.bf16.msra.mxu0 %v1930
    %2211 = vmatprep.subr.bf16.mxu0 %v1929
    %2212 = vmatpush2.bf16.msra.mxu0 %v1928
    %2213 = vmatprep.subr.bf16.mxu0 %v1927
    %2214 = vmatpush2.bf16.msra.mxu0 %v1926
    %2215 = vmatprep.subr.bf16.mxu0 %v1925
    %2216 = vmatpush2.bf16.msra.mxu0 %v1924
    %2217 = vmatprep.mubr.bf16.mxu0 %v1335
    %2218 = vmatmul.mubr.bf16.gmra.mxu0 %v1334
    %v2219 = vpop.f32.mrf.mxu0
    %v2220 = vadd.f32 %v2167, %v2219
    %v2221 = vpop.f32.mrf.mxu0
    %v2222 = vadd.f32 %v2169, %v2221
    %v2223 = vpop.f32.mrf.mxu0
    %v2224 = vadd.f32 %v2171, %v2223
    %v2225 = vpop.f32.mrf.mxu0
    %v2226 = vadd.f32 %v2173, %v2225
    %2227 = vmatprep.mubr.bf16.mxu0 %v1295
    %2228 = vmatmul.mubr.bf16.gmra.mxu0 %v1294
    %v2229 = vpop.f32.mrf.mxu0
    %v2230 = vadd.f32 %v2177, %v2229
    %v2231 = vpop.f32.mrf.mxu0
    %v2232 = vadd.f32 %v2179, %v2231
    %v2233 = vpop.f32.mrf.mxu0
    %v2234 = vadd.f32 %v2181, %v2233
    %v2235 = vpop.f32.mrf.mxu0
    %v2236 = vadd.f32 %v2183, %v2235
    %2237 = vdwg.mxu0
    %2238 = vmatprep.subr.bf16.mxu0 %v1955
    %2239 = vmatpush1.bf16.msra.mxu0 %v1954
    %2240 = vmatprep.subr.bf16.mxu0 %v1953
    %2241 = vmatpush1.bf16.msra.mxu0 %v1952
    %2242 = vmatprep.subr.bf16.mxu0 %v1951
    %2243 = vmatpush1.bf16.msra.mxu0 %v1950
    %2244 = vmatprep.subr.bf16.mxu0 %v1949
    %2245 = vmatpush1.bf16.msra.mxu0 %v1948
    %2246 = vmatprep.subr.bf16.mxu0 %v1947
    %2247 = vmatpush1.bf16.msra.mxu0 %v1946
    %2248 = vmatprep.subr.bf16.mxu0 %v1945
    %2249 = vmatpush1.bf16.msra.mxu0 %v1944
    %2250 = vmatprep.subr.bf16.mxu0 %v1943
    %2251 = vmatpush1.bf16.msra.mxu0 %v1942
    %2252 = vmatprep.subr.bf16.mxu0 %v1941
    %2253 = vmatpush1.bf16.msra.mxu0 %v1940
    %2254 = vmatprep.subr.bf16.mxu0 %v1971
    %2255 = vmatpush2.bf16.msra.mxu0 %v1970
    %2256 = vmatprep.subr.bf16.mxu0 %v1969
    %2257 = vmatpush2.bf16.msra.mxu0 %v1968
    %2258 = vmatprep.subr.bf16.mxu0 %v1967
    %2259 = vmatpush2.bf16.msra.mxu0 %v1966
    %2260 = vmatprep.subr.bf16.mxu0 %v1965
    %2261 = vmatpush2.bf16.msra.mxu0 %v1964
    %2262 = vmatprep.subr.bf16.mxu0 %v1963
    %2263 = vmatpush2.bf16.msra.mxu0 %v1962
    %2264 = vmatprep.subr.bf16.mxu0 %v1961
    %2265 = vmatpush2.bf16.msra.mxu0 %v1960
    %2266 = vmatprep.subr.bf16.mxu0 %v1959
    %2267 = vmatpush2.bf16.msra.mxu0 %v1958
    %2268 = vmatprep.subr.bf16.mxu0 %v1957
    %2269 = vmatpush2.bf16.msra.mxu0 %v1956
    %2270 = vmatprep.mubr.bf16.mxu0 %v1337
    %2271 = vmatmul.mubr.bf16.gmra.mxu0 %v1336
    %v2272 = vpop.f32.mrf.mxu0
    %v2273 = vadd.f32 %v2220, %v2272
    %v2274 = vpop.f32.mrf.mxu0
    %v2275 = vadd.f32 %v2222, %v2274
    %v2276 = vpop.f32.mrf.mxu0
    %v2277 = vadd.f32 %v2224, %v2276
    %v2278 = vpop.f32.mrf.mxu0
    %v2279 = vadd.f32 %v2226, %v2278
    %2280 = vmatprep.mubr.bf16.mxu0 %v1297
    %2281 = vmatmul.mubr.bf16.gmra.mxu0 %v1296
    %v2282 = vpop.f32.mrf.mxu0
    %v2283 = vadd.f32 %v2230, %v2282
    %v2284 = vpop.f32.mrf.mxu0
    %v2285 = vadd.f32 %v2232, %v2284
    %v2286 = vpop.f32.mrf.mxu0
    %v2287 = vadd.f32 %v2234, %v2286
    %v2288 = vpop.f32.mrf.mxu0
    %v2289 = vadd.f32 %v2236, %v2288
    %2290 = vdwg.mxu0
    %2291 = vmatprep.subr.bf16.mxu0 %v1987
    %2292 = vmatpush1.bf16.msra.mxu0 %v1986
    %2293 = vmatprep.subr.bf16.mxu0 %v1985
    %2294 = vmatpush1.bf16.msra.mxu0 %v1984
    %2295 = vmatprep.subr.bf16.mxu0 %v1983
    %2296 = vmatpush1.bf16.msra.mxu0 %v1982
    %2297 = vmatprep.subr.bf16.mxu0 %v1981
    %2298 = vmatpush1.bf16.msra.mxu0 %v1980
    %2299 = vmatprep.subr.bf16.mxu0 %v1979
    %2300 = vmatpush1.bf16.msra.mxu0 %v1978
    %2301 = vmatprep.subr.bf16.mxu0 %v1977
    %2302 = vmatpush1.bf16.msra.mxu0 %v1976
    %2303 = vmatprep.subr.bf16.mxu0 %v1975
    %2304 = vmatpush1.bf16.msra.mxu0 %v1974
    %2305 = vmatprep.subr.bf16.mxu0 %v1973
    %2306 = vmatpush1.bf16.msra.mxu0 %v1972
    %2307 = vmatprep.subr.bf16.mxu0 %v2003
    %2308 = vmatpush2.bf16.msra.mxu0 %v2002
    %2309 = vmatprep.subr.bf16.mxu0 %v2001
    %2310 = vmatpush2.bf16.msra.mxu0 %v2000
    %2311 = vmatprep.subr.bf16.mxu0 %v1999
    %2312 = vmatpush2.bf16.msra.mxu0 %v1998
    %2313 = vmatprep.subr.bf16.mxu0 %v1997
    %2314 = vmatpush2.bf16.msra.mxu0 %v1996
    %2315 = vmatprep.subr.bf16.mxu0 %v1995
    %2316 = vmatpush2.bf16.msra.mxu0 %v1994
    %2317 = vmatprep.subr.bf16.mxu0 %v1993
    %2318 = vmatpush2.bf16.msra.mxu0 %v1992
    %2319 = vmatprep.subr.bf16.mxu0 %v1991
    %2320 = vmatpush2.bf16.msra.mxu0 %v1990
    %2321 = vmatprep.subr.bf16.mxu0 %v1989
    %2322 = vmatpush2.bf16.msra.mxu0 %v1988
    %2323 = vmatprep.mubr.bf16.mxu0 %v1339
    %2324 = vmatmul.mubr.bf16.gmra.mxu0 %v1338
    %v2325 = vpop.f32.mrf.mxu0
    %v2326 = vadd.f32 %v2273, %v2325
    %v2327 = vpop.f32.mrf.mxu0
    %v2328 = vadd.f32 %v2275, %v2327
    %v2329 = vpop.f32.mrf.mxu0
    %v2330 = vadd.f32 %v2277, %v2329
    %v2331 = vpop.f32.mrf.mxu0
    %v2332 = vadd.f32 %v2279, %v2331
    %2333 = vmatprep.mubr.bf16.mxu0 %v1299
    %2334 = vmatmul.mubr.bf16.gmra.mxu0 %v1298
    %v2335 = vpop.f32.mrf.mxu0
    %v2336 = vadd.f32 %v2283, %v2335
    %v2337 = vpop.f32.mrf.mxu0
    %v2338 = vadd.f32 %v2285, %v2337
    %v2339 = vpop.f32.mrf.mxu0
    %v2340 = vadd.f32 %v2287, %v2339
    %v2341 = vpop.f32.mrf.mxu0
    %v2342 = vadd.f32 %v2289, %v2341
    %2343 = vdwg.mxu0
    %vm2344 = vcmp.gt.f32.partialorder %v2326, 0.0
    %vm2345 = vcmp.gt.f32.partialorder %v2328, 0.0
    %vm2346 = vcmp.gt.f32.partialorder %v2330, 0.0
    %vm2347 = vcmp.gt.f32.partialorder %v2332, 0.0
    %vm2348 = vcmp.gt.f32.partialorder %v2336, 0.0
    %vm2349 = vcmp.gt.f32.partialorder %v2338, 0.0
    %vm2350 = vcmp.gt.f32.partialorder %v2340, 0.0
    %vm2351 = vcmp.gt.f32.partialorder %v2342, 0.0
    %v2352 = vmul.f32 %v2326, 0.2
    %v2353 = vmul.f32 %v2328, 0.2
    %v2354 = vmul.f32 %v2330, 0.2
    %v2355 = vmul.f32 %v2332, 0.2
    %v2356 = vmul.f32 %v2336, 0.2
    %v2357 = vmul.f32 %v2338, 0.2
    %v2358 = vmul.f32 %v2340, 0.2
    %v2359 = vmul.f32 %v2342, 0.2
    %v2360 = vsel %vm2344, %v2326, %v2352
    %v2361 = vsel %vm2345, %v2328, %v2353
    %v2362 = vsel %vm2346, %v2330, %v2354
    %v2363 = vsel %vm2347, %v2332, %v2355
    %v2364 = vsel %vm2348, %v2336, %v2356
    %v2365 = vsel %vm2349, %v2338, %v2357
    %v2366 = vsel %vm2350, %v2340, %v2358
    %v2367 = vsel %vm2351, %v2342, %v2359
    %v2368 = vpack.c.bf16 %v2362, %v2360
    %v2369 = vpack.c.bf16 %v2363, %v2361
    %v2370 = vpack.c.bf16 %v2366, %v2364
    %v2371 = vpack.c.bf16 %v2367, %v2365
    %v2372 = vld [vmem:[#allocation13] sm:$0xf]
    %v2373 = vld [vmem:[#allocation13 + $0x4] sm:$0xf]
    %v2374 = vld [vmem:[#allocation13 + $0x8] sm:$0xf]
    %v2375 = vld [vmem:[#allocation13 + $0xc] sm:$0xf]
    %v2376 = vld [vmem:[#allocation13 + $0x10] sm:$0xf]
    %v2377 = vld [vmem:[#allocation13 + $0x14] sm:$0xf]
    %v2378 = vld [vmem:[#allocation13 + $0x18] sm:$0xf]
    %v2379 = vld [vmem:[#allocation13 + $0x1c] sm:$0xf]
    %v2380 = vld [vmem:[#allocation13 + $0x20] sm:$0xf]
    %v2381 = vld [vmem:[#allocation13 + $0x24] sm:$0xf]
    %v2382 = vld [vmem:[#allocation13 + $0x28] sm:$0xf]
    %v2383 = vld [vmem:[#allocation13 + $0x2c] sm:$0xf]
    %v2384 = vld [vmem:[#allocation13 + $0x30] sm:$0xf]
    %v2385 = vld [vmem:[#allocation13 + $0x34] sm:$0xf]
    %v2386 = vld [vmem:[#allocation13 + $0x38] sm:$0xf]
    %v2387 = vld [vmem:[#allocation13 + $0x3c] sm:$0xf]
    %v2388 = vld [vmem:[#allocation13 + $0x40] sm:$0xf]
    %v2389 = vld [vmem:[#allocation13 + $0x44] sm:$0xf]
    %v2390 = vld [vmem:[#allocation13 + $0x48] sm:$0xf]
    %v2391 = vld [vmem:[#allocation13 + $0x4c] sm:$0xf]
    %v2392 = vld [vmem:[#allocation13 + $0x50] sm:$0xf]
    %v2393 = vld [vmem:[#allocation13 + $0x54] sm:$0xf]
    %v2394 = vld [vmem:[#allocation13 + $0x58] sm:$0xf]
    %v2395 = vld [vmem:[#allocation13 + $0x5c] sm:$0xf]
    %v2396 = vld [vmem:[#allocation13 + $0x60] sm:$0xf]
    %v2397 = vld [vmem:[#allocation13 + $0x64] sm:$0xf]
    %v2398 = vld [vmem:[#allocation13 + $0x68] sm:$0xf]
    %v2399 = vld [vmem:[#allocation13 + $0x6c] sm:$0xf]
    %v2400 = vld [vmem:[#allocation13 + $0x70] sm:$0xf]
    %v2401 = vld [vmem:[#allocation13 + $0x74] sm:$0xf]
    %v2402 = vld [vmem:[#allocation13 + $0x78] sm:$0xf]
    %v2403 = vld [vmem:[#allocation13 + $0x7c] sm:$0xf]
    %v2404 = vld [vmem:[%s9] sm:$0x1]
    %v2406 = vlaneseq
    %v2407 = vshrl.u32 %v2406, 7
    %v2408 = vsub.s32 0, %v2407
    %v2409 = vrot.slane %v2404, %v2408
    %v2443 = vunpack.c.l.b16 %v2372
    %v2444 = vunpack.c.l.b16 %v2373
    %v2445 = vunpack.c.l.b16 %v2374
    %v2446 = vunpack.c.l.b16 %v2375
    %v2447 = vunpack.c.l.b16 %v2376
    %v2448 = vunpack.c.l.b16 %v2377
    %v2449 = vunpack.c.l.b16 %v2378
    %v2450 = vunpack.c.l.b16 %v2379
    %v2451 = vunpack.c.l.b16 %v2380
    %v2452 = vunpack.c.l.b16 %v2381
    %v2453 = vunpack.c.l.b16 %v2382
    %v2454 = vunpack.c.l.b16 %v2383
    %v2455 = vunpack.c.l.b16 %v2384
    %v2456 = vunpack.c.l.b16 %v2385
    %v2457 = vunpack.c.l.b16 %v2386
    %v2458 = vunpack.c.l.b16 %v2387
    %v2459 = vunpack.c.l.b16 %v2388
    %v2460 = vunpack.c.l.b16 %v2389
    %v2461 = vunpack.c.l.b16 %v2390
    %v2462 = vunpack.c.l.b16 %v2391
    %v2463 = vunpack.c.l.b16 %v2392
    %v2464 = vunpack.c.l.b16 %v2393
    %v2465 = vunpack.c.l.b16 %v2394
    %v2466 = vunpack.c.l.b16 %v2395
    %v2467 = vunpack.c.l.b16 %v2396
    %v2468 = vunpack.c.l.b16 %v2397
    %v2469 = vunpack.c.l.b16 %v2398
    %v2470 = vunpack.c.l.b16 %v2399
    %v2471 = vunpack.c.l.b16 %v2400
    %v2472 = vunpack.c.l.b16 %v2401
    %v2473 = vunpack.c.l.b16 %v2402
    %v2474 = vunpack.c.l.b16 %v2403
    %v2475 = vpack.c.b16 %v2444, %v2443
    %v2476 = vpack.c.b16 %v2446, %v2445
    %v2477 = vpack.c.b16 %v2448, %v2447
    %v2478 = vpack.c.b16 %v2450, %v2449
    %v2479 = vpack.c.b16 %v2452, %v2451
    %v2480 = vpack.c.b16 %v2454, %v2453
    %v2481 = vpack.c.b16 %v2456, %v2455
    %v2482 = vpack.c.b16 %v2458, %v2457
    %v2483 = vpack.c.b16 %v2460, %v2459
    %v2484 = vpack.c.b16 %v2462, %v2461
    %v2485 = vpack.c.b16 %v2464, %v2463
    %v2486 = vpack.c.b16 %v2466, %v2465
    %v2487 = vpack.c.b16 %v2468, %v2467
    %v2488 = vpack.c.b16 %v2470, %v2469
    %v2489 = vpack.c.b16 %v2472, %v2471
    %v2490 = vpack.c.b16 %v2474, %v2473
    %2507 = vmatprep.subr.bf16.mxu0 0
    %2508 = vmatpush1.bf16.msra.mxu0 %v2482
    %2509 = vmatprep.subr.bf16.mxu0 0
    %2510 = vmatpush1.bf16.msra.mxu0 %v2481
    %2511 = vmatprep.subr.bf16.mxu0 0
    %2512 = vmatpush1.bf16.msra.mxu0 %v2480
    %2513 = vmatprep.subr.bf16.mxu0 0
    %2514 = vmatpush1.bf16.msra.mxu0 %v2479
    %2515 = vmatprep.subr.bf16.mxu0 0
    %2516 = vmatpush1.bf16.msra.mxu0 %v2478
    %2517 = vmatprep.subr.bf16.mxu0 0
    %2518 = vmatpush1.bf16.msra.mxu0 %v2477
    %2519 = vmatprep.subr.bf16.mxu0 0
    %2520 = vmatpush1.bf16.msra.mxu0 %v2476
    %2521 = vmatprep.subr.bf16.mxu0 0
    %2522 = vmatpush1.bf16.msra.mxu0 %v2475
    %2523 = vmatprep.subr.bf16.mxu0 0
    %2524 = vmatpush2.bf16.msra.mxu0 %v2490
    %2525 = vmatprep.subr.bf16.mxu0 0
    %2526 = vmatpush2.bf16.msra.mxu0 %v2489
    %2527 = vmatprep.subr.bf16.mxu0 0
    %2528 = vmatpush2.bf16.msra.mxu0 %v2488
    %2529 = vmatprep.subr.bf16.mxu0 0
    %2530 = vmatpush2.bf16.msra.mxu0 %v2487
    %2531 = vmatprep.subr.bf16.mxu0 0
    %2532 = vmatpush2.bf16.msra.mxu0 %v2486
    %2533 = vmatprep.subr.bf16.mxu0 0
    %2534 = vmatpush2.bf16.msra.mxu0 %v2485
    %2535 = vmatprep.subr.bf16.mxu0 0
    %2536 = vmatpush2.bf16.msra.mxu0 %v2484
    %2537 = vmatprep.subr.bf16.mxu0 0
    %2538 = vmatpush2.bf16.msra.mxu0 %v2483
    %2539 = vmatprep.mubr.bf16.mxu0 %v2369
    %2540 = vmatmul.mubr.bf16.gmra.mxu0 %v2368
    %v2541 = vpop.f32.mrf.mxu0
    %v2542 = vadd.f32 %v2409, %v2541
    %v2543 = vpop.f32.mrf.mxu0
    %v2544 = vpop.f32.mrf.mxu0
    %v2545 = vadd.f32 %v2409, %v2544
    %v2546 = vpop.f32.mrf.mxu0
    %2547 = vmatprep.mubr.bf16.mxu0 %v2371
    %2548 = vmatmul.mubr.bf16.gmra.mxu0 %v2370
    %v2549 = vpop.f32.mrf.mxu0
    %v2550 = vadd.f32 %v2409, %v2549
    %v2551 = vpop.f32.mrf.mxu0
    %v2552 = vpop.f32.mrf.mxu0
    %v2553 = vadd.f32 %v2409, %v2552
    %v2554 = vpop.f32.mrf.mxu0
    %2555 = vdwg.mxu0
    %v2556 = vsub.f32 0.0, %v2542
    %v2557 = vsub.f32 0.0, %v2545
    %v2558 = vsub.f32 0.0, %v2550
    %v2559 = vsub.f32 0.0, %v2553
    %v2560 = vmul.f32 %v2556, 1.442695
    %v2561 = vpow.pop %v2560
    %v2562 = vmul.f32 %v2557, 1.442695
    %v2563 = vpow.pop %v2562
    %v2564 = vmul.f32 %v2558, 1.442695
    %v2565 = vpow.pop %v2564
    %v2566 = vmul.f32 %v2559, 1.442695
    %v2567 = vpow.pop %v2566
    %v2568 = vadd.f32 %v2561, 1.0
    %v2569 = vadd.f32 %v2563, 1.0
    %v2570 = vadd.f32 %v2565, 1.0
    %v2571 = vadd.f32 %v2567, 1.0
    %v2572 = vrcp.pop %v2568
    %v2573 = vmul.f32 1.0, %v2572
    %v2574 = vrcp.pop %v2569
    %v2575 = vmul.f32 1.0, %v2574
    %v2576 = vrcp.pop %v2570
    %v2577 = vmul.f32 1.0, %v2576
    %v2578 = vrcp.pop %v2571
    %v2579 = vmul.f32 1.0, %v2578
    %2580 = vst [vmem:[#allocation15] sm:$0xff] %v2573
    %2581 = vst [vmem:[#allocation15 + $0x8] sm:$0xff] %v2575
    %2582 = vst [vmem:[#allocation15 + $0x10] sm:$0xff] %v2577
    %2583 = vst [vmem:[#allocation15 + $0x18] sm:$0xff] %v2579
    // Predicated region
    $region66: #{tpu_custom_call.1} parent=1 // pred_check
      _
    $region67: #{tpu_custom_call.1} parent=1 // pred_check_branch
      %2585 = sbr.rel (0) target = $region69
    $region68: #{tpu_custom_call.1} parent=1 // pred_region
      %s2587 = ssub.s32 512, 512
      %2588 = vsyncadd [#allocation6], %s2587
      %s2589 = sshll.u32 [#allocation15], 4
      %s2590 = int_to_ptr.vmem [resolvable:$true] %s2589
      %2595 = dma.vmem_to_hbm [thread:$0]  %s2590, 512, %s10, [#allocation6], 128, 128, 8
    $region69: #{tpu_custom_call.1} parent=1 // pred_fallthru
      _
    // Predicated region
    $region70: #{tpu_custom_call.1} parent=1 // pred_check
      _
    $region71: #{tpu_custom_call.1} parent=1 // pred_check_branch
      %2597 = sbr.rel (0) target = $region73
    $region72: #{tpu_custom_call.1} parent=1 // pred_region
      %2598 = dma.done [#allocation6], 512
    $region73: #{tpu_custom_call.1} parent=1 // pred_fallthru
      _
    %2599 = vsyncpa [#allocation5], 1
    %2600 = vsyncpa [#allocation8], 1
    %2601 = vsyncpa [#allocation11], 1
    %2602 = vsyncpa [#allocation14], 1
    %2603 = vsyncpa [#allocation6], 1
  %2604 = vsyncmov [#allocation3]
  %s2605 = vpop.sfrf %2604
  %p2606 = scmp.eq.s32.totalorder %s2605, 0
  %p2607 = pneg %p2606
  %2609 = shalt.err (%p2607)

</llo_original>
